<compile_context>
chip_gen: v5e
topology: v5e:2x2
jax: 0.10.0
libtpu: 0.0.40
codegen_flags: <defaults>
</compile_context>

<pallas_src>
import functools

import numpy as np
import jax
import jax.numpy as jnp
from jax.experimental import pallas as pl
from jax.experimental.pallas import tpu as pltpu

EPS = 1e-5
_LANES = 128
_TWO_PASS_VMEM_LIMIT = 32 * 1024 * 1024


# ---------------------------------------------------------------------------
# numerics helpers
# ---------------------------------------------------------------------------

def _f32_matmul(a, b):
    """~f32-accurate a @ b independent of the default MXU matmul precision:
    split both operands into an exact bf16 head plus a small tail (bf16_3x
    style).  The MXU is otherwise idle in these kernels, so the extra passes
    are free."""
    a_hi = a.astype(jnp.bfloat16).astype(jnp.float32)
    a_lo = a - a_hi
    b_hi = b.astype(jnp.bfloat16).astype(jnp.float32)
    b_lo = b - b_hi
    dot = functools.partial(jnp.dot, preferred_element_type=jnp.float32)
    return dot(a_hi, b_hi) + dot(a_lo, b_hi) + dot(a_hi, b_lo)


def _jax_matmul(a, b):
    return jnp.dot(a, b, precision=jax.lax.Precision.HIGHEST,
                   preferred_element_type=jnp.float32)


def _predictors(mean, w1, b1, lnw, lnb, w2, b2, v1, c1, v2, c2, gamma, beta,
                matmul):
    """scale = 1 + sigmoid(Lin -> LN(affine) -> ReLU -> Lin (mean)) * gamma
       shift = (Lin -> ReLU -> Lin (mean)) * beta"""
    h = matmul(mean, w1) + b1
    hm = jnp.mean(h, axis=-1, keepdims=True)
    hv = jnp.mean((h - hm) ** 2, axis=-1, keepdims=True)
    h = (h - hm) * jax.lax.rsqrt(hv + EPS) * lnw + lnb
    h = jnp.maximum(h, 0.0)
    scale = 1.0 + jax.nn.sigmoid(matmul(h, w2) + b2) * gamma
    g = jnp.maximum(matmul(mean, v1) + c1, 0.0)
    shift = (matmul(g, v2) + c2) * beta
    return scale, shift


def _row_layernorm(x, k, C, S=None, ST=None):
    """Per-logical-row LayerNorm (no affine) on a lane-packed (rows, k*C) f32
    tile.  k == 1: plain lane reduction.  k > 1: segmented reduction through
    tiny 0/1 matmuls (keeps the lane-dense layout; no sublane shuffles)."""
    if k == 1:
        mu = jnp.mean(x, axis=-1, keepdims=True)
        d = x - mu
        var = jnp.mean(d * d, axis=-1, keepdims=True)
        return d * jax.lax.rsqrt(var + EPS)
    inv_c = 1.0 / float(C)
    mu = _f32_matmul(_f32_matmul(x, S), ST) * inv_c          # (rows, k*C)
    d = x - mu
    var = _f32_matmul(_f32_matmul(d * d, S), ST) * inv_c
    return d * jax.lax.rsqrt(var + EPS)


# ---------------------------------------------------------------------------
# kernels
# ---------------------------------------------------------------------------

def _colsum_kernel(n_valid_rows, x_ref, sum_ref):
    """Streaming column-sum over row tiles.  Pure mem-bound: the predictor
    MLPs and their weights are no longer part of this kernel."""
    i = pl.program_id(0)
    rt, L = x_ref.shape

    @pl.when(i == 0)
    def _():
        sum_ref[...] = jnp.zeros_like(sum_ref)

    # Mask rows of a possibly-partial last tile (OOB rows contain garbage).
    row = jax.lax.broadcasted_iota(jnp.int32, (rt, L), 0) + i * rt
    xv = jnp.where(row < n_valid_rows, x_ref[...].astype(jnp.float32), 0.0)
    # Exact f32 sublane reduce; this pass is DMA-bound so the XLU has slack.
    sum_ref[...] += jnp.sum(xv, axis=0, keepdims=True)


def _apply_kernel(k, C, *refs):
    """Per-row LN (no affine) + broadcast scale/shift on lane-packed tiles."""
    if k > 1:
        x_ref, s_ref, st_ref, scale_ref, shift_ref, out_ref = refs
        S, ST = s_ref[...], st_ref[...]
    else:
        x_ref, scale_ref, shift_ref, out_ref = refs
        S = ST = None
    x = x_ref[...].astype(jnp.float32)
    xn = _row_layernorm(x, k, C, S, ST)
    out_ref[...] = (xn * scale_ref[...] + shift_ref[...]).astype(out_ref.dtype)


def _fused_kernel(n_rows, k, C, *refs):
    """Single-pass path (whole packed x resident in VMEM): column mean ->
    predictor MLPs -> per-row LN -> scale/shift.  1 HBM read + 1 write of x."""
    if k > 1:
        (x_ref, s_ref, st_ref, p_ref, pt_ref,
         w1, b1, lnw, lnb, w2, b2, v1, c1, v2, c2, ga, be, out_ref) = refs
        S, ST, P, PT = s_ref[...], st_ref[...], p_ref[...], pt_ref[...]
    else:
        (x_ref, w1, b1, lnw, lnb, w2, b2,
         v1, c1, v2, c2, ga, be, out_ref) = refs
        S = ST = P = PT = None

    x = x_ref[...].astype(jnp.float32)                        # (Np, k*C)
    col_sum = jnp.sum(x, axis=0, keepdims=True)               # exact f32
    if k > 1:
        mean = _f32_matmul(col_sum, P) * (1.0 / float(n_rows))  # fold segments
    else:
        mean = col_sum * (1.0 / float(n_rows))                   # (1, C)

    scale, shift = _predictors(mean, w1[...], b1[...], lnw[...], lnb[...],
                               w2[...], b2[...], v1[...], c1[...],
                               v2[...], c2[...], ga[...], be[...],
                               matmul=_f32_matmul)
    if k > 1:
        scale = _f32_matmul(scale, PT)                        # (1, k*C)
        shift = _f32_matmul(shift, PT)

    xn = _row_layernorm(x, k, C, S, ST)
    out_ref[...] = (xn * scale + shift).astype(out_ref.dtype)


# ---------------------------------------------------------------------------
# wrapper
# ---------------------------------------------------------------------------

def _vmem_capacity_bytes():
    try:
        info = pltpu.get_tpu_info()
        for name in ("vmem_capacity_bytes", "vmem_size_bytes", "vmem_bytes"):
            v = getattr(info, name, None)
            if v:
                return int(v)
    except Exception:
        pass
    return 64 * 1024 * 1024      # v7x per-TC VMEM: smallest current generation


def _pack_factor(N, C):
    """Pack k = 128 // C logical rows per 128-lane vreg row when possible."""
    if C < _LANES and _LANES % C == 0:
        k = _LANES // C
        if N % k == 0:
            return k
    return 1


def _segment_matrices(k, C):
    """0/1 gather/scatter matrices for segmented per-row LN on packed rows."""
    L = k * C
    S = np.zeros((L, k), np.float32)
    S[np.arange(L), np.arange(L) // C] = 1.0                  # segment sum
    P = np.zeros((L, C), np.float32)
    P[np.arange(L), np.arange(L) % C] = 1.0                   # channel fold
    return (jnp.asarray(S), jnp.asarray(np.ascontiguousarray(S.T)),
            jnp.asarray(P), jnp.asarray(np.ascontiguousarray(P.T)))


def _pick_row_tile(np_rows, L, in_bytes, out_bytes, budget_bytes=8 << 20):
    """Largest row tile keeping (2 dbl-buffered in + 2 out + f32 temps) under
    ~8 MiB of live VMEM, clamped to 8..2048 and a multiple of 8."""
    if np_rows <= 8:
        return np_rows
    per_row = L * (2 * in_bytes + 2 * out_bytes + 8)
    rt = int(max(8, min(2048, budget_bytes // per_row)))
    rt -= rt % 8
    if rt >= np_rows:
        return np_rows
    return max(rt, 8)


def adaptive_feature_scaling(x, params, *, row_tile=None, force_two_pass=False):
    N, C = x.shape
    k = _pack_factor(N, C)
    L = k * C
    Np = N // k
    xp = x.reshape(Np, L) if k > 1 else x

    S = ST = P = PT = None
    if k > 1:
        S, ST, P, PT = _segment_matrices(k, C)

    in_b = out_b = x.dtype.itemsize
    cap = _vmem_capacity_bytes()

    p = params
    weight_args = (p["w1"], p["b1"], p["ln_w"], p["ln_b"], p["w2"], p["b2"],
                   p["v1"], p["c1"], p["v2"], p["c2"], p["gamma"], p["beta"])

    # ---------------- fused single-pass path (x fits in VMEM) ----------------
    fused_need = Np * L * (in_b + out_b + 16) + (2 << 20)     # io + f32 temps
    if not force_two_pass and fused_need <= int(0.55 * cap):
        args = (xp,) + ((S, ST, P, PT) if k > 1 else ()) + weight_args
        out_p = pl.pallas_call(
            functools.partial(_fused_kernel, N, k, C),
            out_shape=jax.ShapeDtypeStruct((Np, L), x.dtype),
            compiler_params=pltpu.CompilerParams(
                vmem_limit_bytes=int(0.7 * cap)),
        )(*args)
        return out_p.reshape(N, C) if k > 1 else out_p

    # ---------------- two-pass streaming fallback ----------------------------
    if row_tile is not None:
        rt = min(int(row_tile), Np)
        if rt < Np:
            rt = max(8, rt - rt % 8)
    else:
        rt = _pick_row_tile(Np, L, in_b, out_b)
    grid = (pl.cdiv(Np, rt),)

    # Pass 1: column sum (accumulator output; no weights in VMEM).
    col_sum = pl.pallas_call(
        functools.partial(_colsum_kernel, Np),
        out_shape=jax.ShapeDtypeStruct((1, L), jnp.float32),
        grid=grid,
        in_specs=[pl.BlockSpec((rt, L), lambda i: (i, 0))],
        out_specs=pl.BlockSpec((1, L), lambda i: (0, 0)),
        compiler_params=pltpu.CompilerParams(
            # "arbitrary": the (1, L) output accumulates across the grid.
            # TODO(synk): on v7x, shard this axis over both TCs with per-core
            # partial-sum outputs if the reduce pass profiles below roofline.
            dimension_semantics=("arbitrary",),
            vmem_limit_bytes=_TWO_PASS_VMEM_LIMIT),
    )(xp)

    # Tiny (1, C) predictor MLPs in plain JAX (negligible FLOPs).
    mean = col_sum.reshape(k, C).sum(axis=0, keepdims=True) * (1.0 / float(N))
    scale, shift = _predictors(mean, *weight_args, matmul=_jax_matmul)
    if k > 1:
        scale = jnp.tile(scale, (1, k))                       # (1, k*C)
        shift = jnp.tile(shift, (1, k))

    # Pass 2: per-row LN + scale/shift, tiled over rows ("parallel" for megacore).
    full_vec = pl.BlockSpec((1, L), lambda i: (0, 0))
    in_specs = [pl.BlockSpec((rt, L), lambda i: (i, 0))]
    args = [xp]
    if k > 1:
        in_specs += [pl.BlockSpec((L, k), lambda i: (0, 0)),
                     pl.BlockSpec((k, L), lambda i: (0, 0))]
        args += [S, ST]
    in_specs += [full_vec, full_vec]
    args += [scale, shift]

    out_p = pl.pallas_call(
        functools.partial(_apply_kernel, k, C),
        out_shape=jax.ShapeDtypeStruct((Np, L), x.dtype),
        grid=grid,
        in_specs=in_specs,
        out_specs=pl.BlockSpec((rt, L), lambda i: (i, 0)),
        compiler_params=pltpu.CompilerParams(
            dimension_semantics=("parallel",),
            vmem_limit_bytes=_TWO_PASS_VMEM_LIMIT),
    )(*args)
    return out_p.reshape(N, C) if k > 1 else out_p


# ---------------------------------------------------------------------------
# parameters / reference / demo
# ---------------------------------------------------------------------------

def init_params(key, C):
    Ch = C // 2
    ks = jax.random.split(key, 4)

    def lin(k, fan_in, fan_out):
        kw, kb = jax.random.split(k)
        bound = 1.0 / jnp.sqrt(fan_in)
        w = jax.random.uniform(kw, (fan_in, fan_out), jnp.float32, -bound, bound)
        b = jax.random.uniform(kb, (1, fan_out), jnp.float32, -bound, bound)
        return w, b

    w1, b1 = lin(ks[0], C, C)
    w2, b2 = lin(ks[1], C, C)
    v1, c1 = lin(ks[2], C, Ch)
    v2, c2 = lin(ks[3], Ch, C)
    return dict(
        gamma=jnp.ones((1, C), jnp.float32),
        beta=jnp.zeros((1, C), jnp.float32),
        w1=w1, b1=b1,
        ln_w=jnp.ones((1, C), jnp.float32),
        ln_b=jnp.zeros((1, C), jnp.float32),
        w2=w2, b2=b2,
        v1=v1, c1=c1, v2=v2, c2=c2,
    )


def reference(x, p):
    xf = x.astype(jnp.float32)
    dot = _jax_matmul
    mean = jnp.mean(xf, axis=0, keepdims=True)
    mu = jnp.mean(xf, axis=-1, keepdims=True)
    var = jnp.mean((xf - mu) ** 2, axis=-1, keepdims=True)
    xn = (xf - mu) / jnp.sqrt(var + EPS)

    h = dot(mean, p["w1"]) + p["b1"]
    hm = jnp.mean(h, -1, keepdims=True)
    hv = jnp.mean((h - hm) ** 2, -1, keepdims=True)
    h = (h - hm) / jnp.sqrt(hv + EPS) * p["ln_w"] + p["ln_b"]
    h = jnp.maximum(h, 0.0)
    scale = 1.0 + jax.nn.sigmoid(dot(h, p["w2"]) + p["b2"]) * p["gamma"]

    g = jnp.maximum(dot(mean, p["v1"]) + p["c1"], 0.0)
    shift = (dot(g, p["v2"]) + p["c2"]) * p["beta"]
    return (xn * scale + shift).astype(x.dtype)


if __name__ == "__main__":
    root = jax.random.PRNGKey(0)

    def check(N, C, **kw):
        kx, kp = jax.random.split(jax.random.fold_in(root, N * 1000 + C))
        x = jax.random.normal(kx, (N, C), jnp.float32)
        params = init_params(kp, C)
        out = jax.block_until_ready(adaptive_feature_scaling(x, params, **kw))
        ref = reference(x, params)
        assert out.shape == (N, C) and out.dtype == x.dtype
        err = jnp.max(jnp.abs(out - ref))
        assert jnp.allclose(out, ref, rtol=3e-5, atol=3e-4), (
            f"mismatch N={N} C={C}: max|err|={err}")

    check(8, 32)                                          # fused, lane-packed (k=4)
    check(1000, 32, force_two_pass=True, row_tile=128)    # two-pass, partial tile mask
    check(16, 48)                                         # fused, unpacked (k=1)
    print("KERNEL_OK")
</pallas_src>

<mosaic_0001>
module attributes {stable_mosaic.version = 11 : i64} {
  func.func @_fused_kernel(%arg0: memref<2x128xf32, #tpu.memory_space<vmem>>, %arg1: memref<128x4xf32, #tpu.memory_space<vmem>>, %arg2: memref<4x128xf32, #tpu.memory_space<vmem>>, %arg3: memref<128x32xf32, #tpu.memory_space<vmem>>, %arg4: memref<32x128xf32, #tpu.memory_space<vmem>>, %arg5: memref<32x32xf32, #tpu.memory_space<vmem>>, %arg6: memref<1x32xf32, #tpu.memory_space<vmem>>, %arg7: memref<1x32xf32, #tpu.memory_space<vmem>>, %arg8: memref<1x32xf32, #tpu.memory_space<vmem>>, %arg9: memref<32x32xf32, #tpu.memory_space<vmem>>, %arg10: memref<1x32xf32, #tpu.memory_space<vmem>>, %arg11: memref<32x16xf32, #tpu.memory_space<vmem>>, %arg12: memref<1x16xf32, #tpu.memory_space<vmem>>, %arg13: memref<16x32xf32, #tpu.memory_space<vmem>>, %arg14: memref<1x32xf32, #tpu.memory_space<vmem>>, %arg15: memref<1x32xf32, #tpu.memory_space<vmem>>, %arg16: memref<1x32xf32, #tpu.memory_space<vmem>>, %arg17: memref<2x128xf32, #tpu.memory_space<vmem>>) attributes {dimension_semantics = [], scalar_prefetch = 0 : i64, scratch_operands = 0 : i64, tpu.core_type = #tpu.core_type<tc>} {
    %c0 = arith.constant 0 : index
    %c0_0 = arith.constant 0 : index
    %0 = vector.load %arg1[%c0, %c0_0] : memref<128x4xf32, #tpu.memory_space<vmem>>, vector<128x4xf32>
    %c0_1 = arith.constant 0 : index
    %c0_2 = arith.constant 0 : index
    %1 = vector.load %arg2[%c0_1, %c0_2] : memref<4x128xf32, #tpu.memory_space<vmem>>, vector<4x128xf32>
    %c0_3 = arith.constant 0 : index
    %c0_4 = arith.constant 0 : index
    %2 = vector.load %arg3[%c0_3, %c0_4] : memref<128x32xf32, #tpu.memory_space<vmem>>, vector<128x32xf32>
    %c0_5 = arith.constant 0 : index
    %c0_6 = arith.constant 0 : index
    %3 = vector.load %arg4[%c0_5, %c0_6] : memref<32x128xf32, #tpu.memory_space<vmem>>, vector<32x128xf32>
    %c0_7 = arith.constant 0 : index
    %c0_8 = arith.constant 0 : index
    %4 = vector.load %arg0[%c0_7, %c0_8] : memref<2x128xf32, #tpu.memory_space<vmem>>, vector<2x128xf32>
    %cst = arith.constant dense<0.000000e+00> : vector<128xf32>
    %5 = vector.multi_reduction <add>, %4, %cst [0] : vector<2x128xf32> to vector<128xf32>
    %6 = vector.shape_cast %5 : vector<128xf32> to vector<1x128xf32>
    %7 = arith.truncf %6 : vector<1x128xf32> to vector<1x128xbf16>
    %8 = arith.extf %7 : vector<1x128xbf16> to vector<1x128xf32>
    %9 = arith.subf %6, %8 : vector<1x128xf32>
    %10 = arith.truncf %2 : vector<128x32xf32> to vector<128x32xbf16>
    %11 = arith.extf %10 : vector<128x32xbf16> to vector<128x32xf32>
    %12 = arith.subf %2, %11 : vector<128x32xf32>
    %cst_9 = arith.constant dense<0.000000e+00> : vector<1x32xf32>
    %13 = tpu.matmul %8, %11, %cst_9 {dimension_numbers = #tpu.dot_dimension_numbers<[1], [0], [0], [1], [0, 0, 1, 1], [], []>} : vector<1x128xf32>, vector<128x32xf32>, vector<1x32xf32> -> vector<1x32xf32>
    %cst_10 = arith.constant dense<0.000000e+00> : vector<1x32xf32>
    %14 = tpu.matmul %9, %11, %cst_10 {dimension_numbers = #tpu.dot_dimension_numbers<[1], [0], [0], [1], [0, 0, 1, 1], [], []>} : vector<1x128xf32>, vector<128x32xf32>, vector<1x32xf32> -> vector<1x32xf32>
    %15 = arith.addf %13, %14 : vector<1x32xf32>
    %cst_11 = arith.constant dense<0.000000e+00> : vector<1x32xf32>
    %16 = tpu.matmul %8, %12, %cst_11 {dimension_numbers = #tpu.dot_dimension_numbers<[1], [0], [0], [1], [0, 0, 1, 1], [], []>} : vector<1x128xf32>, vector<128x32xf32>, vector<1x32xf32> -> vector<1x32xf32>
    %17 = arith.addf %15, %16 : vector<1x32xf32>
    %cst_12 = arith.constant 1.250000e-01 : f32
    %18 = vector.broadcast %cst_12 : f32 to vector<1x32xf32>
    %19 = arith.mulf %17, %18 : vector<1x32xf32>
    %c0_13 = arith.constant 0 : index
    %c0_14 = arith.constant 0 : index
    %20 = vector.load %arg5[%c0_13, %c0_14] : memref<32x32xf32, #tpu.memory_space<vmem>>, vector<32x32xf32>
    %c0_15 = arith.constant 0 : index
    %c0_16 = arith.constant 0 : index
    %21 = vector.load %arg6[%c0_15, %c0_16] : memref<1x32xf32, #tpu.memory_space<vmem>>, vector<1x32xf32>
    %c0_17 = arith.constant 0 : index
    %c0_18 = arith.constant 0 : index
    %22 = vector.load %arg7[%c0_17, %c0_18] : memref<1x32xf32, #tpu.memory_space<vmem>>, vector<1x32xf32>
    %c0_19 = arith.constant 0 : index
    %c0_20 = arith.constant 0 : index
    %23 = vector.load %arg8[%c0_19, %c0_20] : memref<1x32xf32, #tpu.memory_space<vmem>>, vector<1x32xf32>
    %c0_21 = arith.constant 0 : index
    %c0_22 = arith.constant 0 : index
    %24 = vector.load %arg9[%c0_21, %c0_22] : memref<32x32xf32, #tpu.memory_space<vmem>>, vector<32x32xf32>
    %c0_23 = arith.constant 0 : index
    %c0_24 = arith.constant 0 : index
    %25 = vector.load %arg10[%c0_23, %c0_24] : memref<1x32xf32, #tpu.memory_space<vmem>>, vector<1x32xf32>
    %c0_25 = arith.constant 0 : index
    %c0_26 = arith.constant 0 : index
    %26 = vector.load %arg11[%c0_25, %c0_26] : memref<32x16xf32, #tpu.memory_space<vmem>>, vector<32x16xf32>
    %c0_27 = arith.constant 0 : index
    %c0_28 = arith.constant 0 : index
    %27 = vector.load %arg12[%c0_27, %c0_28] : memref<1x16xf32, #tpu.memory_space<vmem>>, vector<1x16xf32>
    %c0_29 = arith.constant 0 : index
    %c0_30 = arith.constant 0 : index
    %28 = vector.load %arg13[%c0_29, %c0_30] : memref<16x32xf32, #tpu.memory_space<vmem>>, vector<16x32xf32>
    %c0_31 = arith.constant 0 : index
    %c0_32 = arith.constant 0 : index
    %29 = vector.load %arg14[%c0_31, %c0_32] : memref<1x32xf32, #tpu.memory_space<vmem>>, vector<1x32xf32>
    %c0_33 = arith.constant 0 : index
    %c0_34 = arith.constant 0 : index
    %30 = vector.load %arg15[%c0_33, %c0_34] : memref<1x32xf32, #tpu.memory_space<vmem>>, vector<1x32xf32>
    %c0_35 = arith.constant 0 : index
    %c0_36 = arith.constant 0 : index
    %31 = vector.load %arg16[%c0_35, %c0_36] : memref<1x32xf32, #tpu.memory_space<vmem>>, vector<1x32xf32>
    %32 = arith.truncf %19 : vector<1x32xf32> to vector<1x32xbf16>
    %33 = arith.extf %32 : vector<1x32xbf16> to vector<1x32xf32>
    %34 = arith.subf %19, %33 : vector<1x32xf32>
    %35 = arith.truncf %20 : vector<32x32xf32> to vector<32x32xbf16>
    %36 = arith.extf %35 : vector<32x32xbf16> to vector<32x32xf32>
    %37 = arith.subf %20, %36 : vector<32x32xf32>
    %cst_37 = arith.constant dense<0.000000e+00> : vector<1x32xf32>
    %38 = tpu.matmul %33, %36, %cst_37 {dimension_numbers = #tpu.dot_dimension_numbers<[1], [0], [0], [1], [0, 0, 1, 1], [], []>} : vector<1x32xf32>, vector<32x32xf32>, vector<1x32xf32> -> vector<1x32xf32>
    %cst_38 = arith.constant dense<0.000000e+00> : vector<1x32xf32>
    %39 = tpu.matmul %34, %36, %cst_38 {dimension_numbers = #tpu.dot_dimension_numbers<[1], [0], [0], [1], [0, 0, 1, 1], [], []>} : vector<1x32xf32>, vector<32x32xf32>, vector<1x32xf32> -> vector<1x32xf32>
    %40 = arith.addf %38, %39 : vector<1x32xf32>
    %cst_39 = arith.constant dense<0.000000e+00> : vector<1x32xf32>
    %41 = tpu.matmul %33, %37, %cst_39 {dimension_numbers = #tpu.dot_dimension_numbers<[1], [0], [0], [1], [0, 0, 1, 1], [], []>} : vector<1x32xf32>, vector<32x32xf32>, vector<1x32xf32> -> vector<1x32xf32>
    %42 = arith.addf %40, %41 : vector<1x32xf32>
    %43 = arith.addf %42, %21 : vector<1x32xf32>
    %cst_40 = arith.constant dense<0.000000e+00> : vector<1xf32>
    %44 = vector.multi_reduction <add>, %43, %cst_40 [1] : vector<1x32xf32> to vector<1xf32>
    %45 = vector.shape_cast %44 : vector<1xf32> to vector<1x1xf32>
    %cst_41 = arith.constant 3.200000e+01 : f32
    %46 = vector.broadcast %cst_41 : f32 to vector<1x1xf32>
    %47 = arith.divf %45, %46 : vector<1x1xf32>
    %48 = vector.broadcast %47 : vector<1x1xf32> to vector<1x32xf32>
    %49 = arith.subf %43, %48 : vector<1x32xf32>
    %50 = arith.mulf %49, %49 : vector<1x32xf32>
    %cst_42 = arith.constant dense<0.000000e+00> : vector<1xf32>
    %51 = vector.multi_reduction <add>, %50, %cst_42 [1] : vector<1x32xf32> to vector<1xf32>
    %52 = vector.shape_cast %51 : vector<1xf32> to vector<1x1xf32>
    %cst_43 = arith.constant 3.200000e+01 : f32
    %53 = vector.broadcast %cst_43 : f32 to vector<1x1xf32>
    %54 = arith.divf %52, %53 : vector<1x1xf32>
    %55 = vector.broadcast %47 : vector<1x1xf32> to vector<1x32xf32>
    %56 = arith.subf %43, %55 : vector<1x32xf32>
    %cst_44 = arith.constant 9.99999974E-6 : f32
    %57 = vector.broadcast %cst_44 : f32 to vector<1x1xf32>
    %58 = arith.addf %54, %57 : vector<1x1xf32>
    %59 = math.rsqrt %58 : vector<1x1xf32>
    %60 = vector.broadcast %59 : vector<1x1xf32> to vector<1x32xf32>
    %61 = arith.mulf %56, %60 : vector<1x32xf32>
    %62 = arith.mulf %61, %22 : vector<1x32xf32>
    %63 = arith.addf %62, %23 : vector<1x32xf32>
    %cst_45 = arith.constant 0.000000e+00 : f32
    %64 = vector.broadcast %cst_45 : f32 to vector<1x32xf32>
    %65 = arith.maximumf %63, %64 : vector<1x32xf32>
    %66 = arith.truncf %65 : vector<1x32xf32> to vector<1x32xbf16>
    %67 = arith.extf %66 : vector<1x32xbf16> to vector<1x32xf32>
    %68 = arith.subf %65, %67 : vector<1x32xf32>
    %69 = arith.truncf %24 : vector<32x32xf32> to vector<32x32xbf16>
    %70 = arith.extf %69 : vector<32x32xbf16> to vector<32x32xf32>
    %71 = arith.subf %24, %70 : vector<32x32xf32>
    %cst_46 = arith.constant dense<0.000000e+00> : vector<1x32xf32>
    %72 = tpu.matmul %67, %70, %cst_46 {dimension_numbers = #tpu.dot_dimension_numbers<[1], [0], [0], [1], [0, 0, 1, 1], [], []>} : vector<1x32xf32>, vector<32x32xf32>, vector<1x32xf32> -> vector<1x32xf32>
    %cst_47 = arith.constant dense<0.000000e+00> : vector<1x32xf32>
    %73 = tpu.matmul %68, %70, %cst_47 {dimension_numbers = #tpu.dot_dimension_numbers<[1], [0], [0], [1], [0, 0, 1, 1], [], []>} : vector<1x32xf32>, vector<32x32xf32>, vector<1x32xf32> -> vector<1x32xf32>
    %74 = arith.addf %72, %73 : vector<1x32xf32>
    %cst_48 = arith.constant dense<0.000000e+00> : vector<1x32xf32>
    %75 = tpu.matmul %67, %71, %cst_48 {dimension_numbers = #tpu.dot_dimension_numbers<[1], [0], [0], [1], [0, 0, 1, 1], [], []>} : vector<1x32xf32>, vector<32x32xf32>, vector<1x32xf32> -> vector<1x32xf32>
    %76 = arith.addf %74, %75 : vector<1x32xf32>
    %77 = arith.addf %76, %25 : vector<1x32xf32>
    %78 = arith.negf %77 : vector<1x32xf32>
    %79 = math.exp %78 : vector<1x32xf32>
    %cst_49 = arith.constant 1.000000e+00 : f32
    %80 = vector.broadcast %cst_49 : f32 to vector<1x32xf32>
    %81 = arith.addf %80, %79 : vector<1x32xf32>
    %82 = arith.divf %80, %81 : vector<1x32xf32>
    %83 = arith.mulf %82, %30 : vector<1x32xf32>
    %cst_50 = arith.constant 1.000000e+00 : f32
    %84 = vector.broadcast %cst_50 : f32 to vector<1x32xf32>
    %85 = arith.addf %84, %83 : vector<1x32xf32>
    %86 = arith.truncf %19 : vector<1x32xf32> to vector<1x32xbf16>
    %87 = arith.extf %86 : vector<1x32xbf16> to vector<1x32xf32>
    %88 = arith.subf %19, %87 : vector<1x32xf32>
    %89 = arith.truncf %26 : vector<32x16xf32> to vector<32x16xbf16>
    %90 = arith.extf %89 : vector<32x16xbf16> to vector<32x16xf32>
    %91 = arith.subf %26, %90 : vector<32x16xf32>
    %cst_51 = arith.constant dense<0.000000e+00> : vector<1x16xf32>
    %92 = tpu.matmul %87, %90, %cst_51 {dimension_numbers = #tpu.dot_dimension_numbers<[1], [0], [0], [1], [0, 0, 1, 1], [], []>} : vector<1x32xf32>, vector<32x16xf32>, vector<1x16xf32> -> vector<1x16xf32>
    %cst_52 = arith.constant dense<0.000000e+00> : vector<1x16xf32>
    %93 = tpu.matmul %88, %90, %cst_52 {dimension_numbers = #tpu.dot_dimension_numbers<[1], [0], [0], [1], [0, 0, 1, 1], [], []>} : vector<1x32xf32>, vector<32x16xf32>, vector<1x16xf32> -> vector<1x16xf32>
    %94 = arith.addf %92, %93 : vector<1x16xf32>
    %cst_53 = arith.constant dense<0.000000e+00> : vector<1x16xf32>
    %95 = tpu.matmul %87, %91, %cst_53 {dimension_numbers = #tpu.dot_dimension_numbers<[1], [0], [0], [1], [0, 0, 1, 1], [], []>} : vector<1x32xf32>, vector<32x16xf32>, vector<1x16xf32> -> vector<1x16xf32>
    %96 = arith.addf %94, %95 : vector<1x16xf32>
    %97 = arith.addf %96, %27 : vector<1x16xf32>
    %cst_54 = arith.constant 0.000000e+00 : f32
    %98 = vector.broadcast %cst_54 : f32 to vector<1x16xf32>
    %99 = arith.maximumf %97, %98 : vector<1x16xf32>
    %100 = arith.truncf %99 : vector<1x16xf32> to vector<1x16xbf16>
    %101 = arith.extf %100 : vector<1x16xbf16> to vector<1x16xf32>
    %102 = arith.subf %99, %101 : vector<1x16xf32>
    %103 = arith.truncf %28 : vector<16x32xf32> to vector<16x32xbf16>
    %104 = arith.extf %103 : vector<16x32xbf16> to vector<16x32xf32>
    %105 = arith.subf %28, %104 : vector<16x32xf32>
    %cst_55 = arith.constant dense<0.000000e+00> : vector<1x32xf32>
    %106 = tpu.matmul %101, %104, %cst_55 {dimension_numbers = #tpu.dot_dimension_numbers<[1], [0], [0], [1], [0, 0, 1, 1], [], []>} : vector<1x16xf32>, vector<16x32xf32>, vector<1x32xf32> -> vector<1x32xf32>
    %cst_56 = arith.constant dense<0.000000e+00> : vector<1x32xf32>
    %107 = tpu.matmul %102, %104, %cst_56 {dimension_numbers = #tpu.dot_dimension_numbers<[1], [0], [0], [1], [0, 0, 1, 1], [], []>} : vector<1x16xf32>, vector<16x32xf32>, vector<1x32xf32> -> vector<1x32xf32>
    %108 = arith.addf %106, %107 : vector<1x32xf32>
    %cst_57 = arith.constant dense<0.000000e+00> : vector<1x32xf32>
    %109 = tpu.matmul %101, %105, %cst_57 {dimension_numbers = #tpu.dot_dimension_numbers<[1], [0], [0], [1], [0, 0, 1, 1], [], []>} : vector<1x16xf32>, vector<16x32xf32>, vector<1x32xf32> -> vector<1x32xf32>
    %110 = arith.addf %108, %109 : vector<1x32xf32>
    %111 = arith.addf %110, %29 : vector<1x32xf32>
    %112 = arith.mulf %111, %31 : vector<1x32xf32>
    %113 = arith.truncf %85 : vector<1x32xf32> to vector<1x32xbf16>
    %114 = arith.extf %113 : vector<1x32xbf16> to vector<1x32xf32>
    %115 = arith.subf %85, %114 : vector<1x32xf32>
    %116 = arith.truncf %3 : vector<32x128xf32> to vector<32x128xbf16>
    %117 = arith.extf %116 : vector<32x128xbf16> to vector<32x128xf32>
    %118 = arith.subf %3, %117 : vector<32x128xf32>
    %cst_58 = arith.constant dense<0.000000e+00> : vector<1x128xf32>
    %119 = tpu.matmul %114, %117, %cst_58 {dimension_numbers = #tpu.dot_dimension_numbers<[1], [0], [0], [1], [0, 0, 1, 1], [], []>} : vector<1x32xf32>, vector<32x128xf32>, vector<1x128xf32> -> vector<1x128xf32>
    %cst_59 = arith.constant dense<0.000000e+00> : vector<1x128xf32>
    %120 = tpu.matmul %115, %117, %cst_59 {dimension_numbers = #tpu.dot_dimension_numbers<[1], [0], [0], [1], [0, 0, 1, 1], [], []>} : vector<1x32xf32>, vector<32x128xf32>, vector<1x128xf32> -> vector<1x128xf32>
    %121 = arith.addf %119, %120 : vector<1x128xf32>
    %cst_60 = arith.constant dense<0.000000e+00> : vector<1x128xf32>
    %122 = tpu.matmul %114, %118, %cst_60 {dimension_numbers = #tpu.dot_dimension_numbers<[1], [0], [0], [1], [0, 0, 1, 1], [], []>} : vector<1x32xf32>, vector<32x128xf32>, vector<1x128xf32> -> vector<1x128xf32>
    %123 = arith.addf %121, %122 : vector<1x128xf32>
    %124 = arith.truncf %112 : vector<1x32xf32> to vector<1x32xbf16>
    %125 = arith.extf %124 : vector<1x32xbf16> to vector<1x32xf32>
    %126 = arith.subf %112, %125 : vector<1x32xf32>
    %127 = arith.truncf %3 : vector<32x128xf32> to vector<32x128xbf16>
    %128 = arith.extf %127 : vector<32x128xbf16> to vector<32x128xf32>
    %129 = arith.subf %3, %128 : vector<32x128xf32>
    %cst_61 = arith.constant dense<0.000000e+00> : vector<1x128xf32>
    %130 = tpu.matmul %125, %128, %cst_61 {dimension_numbers = #tpu.dot_dimension_numbers<[1], [0], [0], [1], [0, 0, 1, 1], [], []>} : vector<1x32xf32>, vector<32x128xf32>, vector<1x128xf32> -> vector<1x128xf32>
    %cst_62 = arith.constant dense<0.000000e+00> : vector<1x128xf32>
    %131 = tpu.matmul %126, %128, %cst_62 {dimension_numbers = #tpu.dot_dimension_numbers<[1], [0], [0], [1], [0, 0, 1, 1], [], []>} : vector<1x32xf32>, vector<32x128xf32>, vector<1x128xf32> -> vector<1x128xf32>
    %132 = arith.addf %130, %131 : vector<1x128xf32>
    %cst_63 = arith.constant dense<0.000000e+00> : vector<1x128xf32>
    %133 = tpu.matmul %125, %129, %cst_63 {dimension_numbers = #tpu.dot_dimension_numbers<[1], [0], [0], [1], [0, 0, 1, 1], [], []>} : vector<1x32xf32>, vector<32x128xf32>, vector<1x128xf32> -> vector<1x128xf32>
    %134 = arith.addf %132, %133 : vector<1x128xf32>
    %135 = arith.truncf %4 : vector<2x128xf32> to vector<2x128xbf16>
    %136 = arith.extf %135 : vector<2x128xbf16> to vector<2x128xf32>
    %137 = arith.subf %4, %136 : vector<2x128xf32>
    %138 = arith.truncf %0 : vector<128x4xf32> to vector<128x4xbf16>
    %139 = arith.extf %138 : vector<128x4xbf16> to vector<128x4xf32>
    %140 = arith.subf %0, %139 : vector<128x4xf32>
    %cst_64 = arith.constant dense<0.000000e+00> : vector<2x4xf32>
    %141 = tpu.matmul %136, %139, %cst_64 {dimension_numbers = #tpu.dot_dimension_numbers<[1], [0], [0], [1], [0, 0, 1, 1], [], []>} : vector<2x128xf32>, vector<128x4xf32>, vector<2x4xf32> -> vector<2x4xf32>
    %cst_65 = arith.constant dense<0.000000e+00> : vector<2x4xf32>
    %142 = tpu.matmul %137, %139, %cst_65 {dimension_numbers = #tpu.dot_dimension_numbers<[1], [0], [0], [1], [0, 0, 1, 1], [], []>} : vector<2x128xf32>, vector<128x4xf32>, vector<2x4xf32> -> vector<2x4xf32>
    %143 = arith.addf %141, %142 : vector<2x4xf32>
    %cst_66 = arith.constant dense<0.000000e+00> : vector<2x4xf32>
    %144 = tpu.matmul %136, %140, %cst_66 {dimension_numbers = #tpu.dot_dimension_numbers<[1], [0], [0], [1], [0, 0, 1, 1], [], []>} : vector<2x128xf32>, vector<128x4xf32>, vector<2x4xf32> -> vector<2x4xf32>
    %145 = arith.addf %143, %144 : vector<2x4xf32>
    %146 = arith.truncf %145 : vector<2x4xf32> to vector<2x4xbf16>
    %147 = arith.extf %146 : vector<2x4xbf16> to vector<2x4xf32>
    %148 = arith.subf %145, %147 : vector<2x4xf32>
    %149 = arith.truncf %1 : vector<4x128xf32> to vector<4x128xbf16>
    %150 = arith.extf %149 : vector<4x128xbf16> to vector<4x128xf32>
    %151 = arith.subf %1, %150 : vector<4x128xf32>
    %cst_67 = arith.constant dense<0.000000e+00> : vector<2x128xf32>
    %152 = tpu.matmul %147, %150, %cst_67 {dimension_numbers = #tpu.dot_dimension_numbers<[1], [0], [0], [1], [0, 0, 1, 1], [], []>} : vector<2x4xf32>, vector<4x128xf32>, vector<2x128xf32> -> vector<2x128xf32>
    %cst_68 = arith.constant dense<0.000000e+00> : vector<2x128xf32>
    %153 = tpu.matmul %148, %150, %cst_68 {dimension_numbers = #tpu.dot_dimension_numbers<[1], [0], [0], [1], [0, 0, 1, 1], [], []>} : vector<2x4xf32>, vector<4x128xf32>, vector<2x128xf32> -> vector<2x128xf32>
    %154 = arith.addf %152, %153 : vector<2x128xf32>
    %cst_69 = arith.constant dense<0.000000e+00> : vector<2x128xf32>
    %155 = tpu.matmul %147, %151, %cst_69 {dimension_numbers = #tpu.dot_dimension_numbers<[1], [0], [0], [1], [0, 0, 1, 1], [], []>} : vector<2x4xf32>, vector<4x128xf32>, vector<2x128xf32> -> vector<2x128xf32>
    %156 = arith.addf %154, %155 : vector<2x128xf32>
    %cst_70 = arith.constant 3.125000e-02 : f32
    %157 = vector.broadcast %cst_70 : f32 to vector<2x128xf32>
    %158 = arith.mulf %156, %157 : vector<2x128xf32>
    %159 = arith.subf %4, %158 : vector<2x128xf32>
    %160 = arith.mulf %159, %159 : vector<2x128xf32>
    %161 = arith.truncf %160 : vector<2x128xf32> to vector<2x128xbf16>
    %162 = arith.extf %161 : vector<2x128xbf16> to vector<2x128xf32>
    %163 = arith.subf %160, %162 : vector<2x128xf32>
    %164 = arith.truncf %0 : vector<128x4xf32> to vector<128x4xbf16>
    %165 = arith.extf %164 : vector<128x4xbf16> to vector<128x4xf32>
    %166 = arith.subf %0, %165 : vector<128x4xf32>
    %cst_71 = arith.constant dense<0.000000e+00> : vector<2x4xf32>
    %167 = tpu.matmul %162, %165, %cst_71 {dimension_numbers = #tpu.dot_dimension_numbers<[1], [0], [0], [1], [0, 0, 1, 1], [], []>} : vector<2x128xf32>, vector<128x4xf32>, vector<2x4xf32> -> vector<2x4xf32>
    %cst_72 = arith.constant dense<0.000000e+00> : vector<2x4xf32>
    %168 = tpu.matmul %163, %165, %cst_72 {dimension_numbers = #tpu.dot_dimension_numbers<[1], [0], [0], [1], [0, 0, 1, 1], [], []>} : vector<2x128xf32>, vector<128x4xf32>, vector<2x4xf32> -> vector<2x4xf32>
    %169 = arith.addf %167, %168 : vector<2x4xf32>
    %cst_73 = arith.constant dense<0.000000e+00> : vector<2x4xf32>
    %170 = tpu.matmul %162, %166, %cst_73 {dimension_numbers = #tpu.dot_dimension_numbers<[1], [0], [0], [1], [0, 0, 1, 1], [], []>} : vector<2x128xf32>, vector<128x4xf32>, vector<2x4xf32> -> vector<2x4xf32>
    %171 = arith.addf %169, %170 : vector<2x4xf32>
    %172 = arith.truncf %171 : vector<2x4xf32> to vector<2x4xbf16>
    %173 = arith.extf %172 : vector<2x4xbf16> to vector<2x4xf32>
    %174 = arith.subf %171, %173 : vector<2x4xf32>
    %175 = arith.truncf %1 : vector<4x128xf32> to vector<4x128xbf16>
    %176 = arith.extf %175 : vector<4x128xbf16> to vector<4x128xf32>
    %177 = arith.subf %1, %176 : vector<4x128xf32>
    %cst_74 = arith.constant dense<0.000000e+00> : vector<2x128xf32>
    %178 = tpu.matmul %173, %176, %cst_74 {dimension_numbers = #tpu.dot_dimension_numbers<[1], [0], [0], [1], [0, 0, 1, 1], [], []>} : vector<2x4xf32>, vector<4x128xf32>, vector<2x128xf32> -> vector<2x128xf32>
    %cst_75 = arith.constant dense<0.000000e+00> : vector<2x128xf32>
    %179 = tpu.matmul %174, %176, %cst_75 {dimension_numbers = #tpu.dot_dimension_numbers<[1], [0], [0], [1], [0, 0, 1, 1], [], []>} : vector<2x4xf32>, vector<4x128xf32>, vector<2x128xf32> -> vector<2x128xf32>
    %180 = arith.addf %178, %179 : vector<2x128xf32>
    %cst_76 = arith.constant dense<0.000000e+00> : vector<2x128xf32>
    %181 = tpu.matmul %173, %177, %cst_76 {dimension_numbers = #tpu.dot_dimension_numbers<[1], [0], [0], [1], [0, 0, 1, 1], [], []>} : vector<2x4xf32>, vector<4x128xf32>, vector<2x128xf32> -> vector<2x128xf32>
    %182 = arith.addf %180, %181 : vector<2x128xf32>
    %cst_77 = arith.constant 3.125000e-02 : f32
    %183 = vector.broadcast %cst_77 : f32 to vector<2x128xf32>
    %184 = arith.mulf %182, %183 : vector<2x128xf32>
    %cst_78 = arith.constant 9.99999974E-6 : f32
    %185 = vector.broadcast %cst_78 : f32 to vector<2x128xf32>
    %186 = arith.addf %184, %185 : vector<2x128xf32>
    %187 = math.rsqrt %186 : vector<2x128xf32>
    %188 = arith.mulf %159, %187 : vector<2x128xf32>
    %189 = vector.broadcast %123 : vector<1x128xf32> to vector<2x128xf32>
    %190 = arith.mulf %188, %189 : vector<2x128xf32>
    %191 = vector.broadcast %134 : vector<1x128xf32> to vector<2x128xf32>
    %192 = arith.addf %190, %191 : vector<2x128xf32>
    %c0_79 = arith.constant 0 : index
    %c0_80 = arith.constant 0 : index
    %193 = vector.load %arg17[%c0_79, %c0_80] : memref<2x128xf32, #tpu.memory_space<vmem>>, vector<2x128xf32>
    tpu.vector_store %arg17[%c0_79, %c0_80], %192 {strides = array<i32>} : memref<2x128xf32, #tpu.memory_space<vmem>>, vector<2x128xf32>,
    return
  }
}

</mosaic_0001>

<llo_original>
// kernel: tpu_custom_call.1
$region0: #{tpu_custom_call.1}
  #allocation0 [shape = 'u32[]', space=smem, size = 0x4, offset = 0x4, fixed_abs, tag = 'smem constant byte address 0x4 - core index']
  #allocation1 [shape = 'u32[72,128]{1,0:T(1,128)}', space=vmem, size = 0x9000, scoped, tag = 'internal scratch']
  %s0 = inlined_call_operand.vmem [shape: f32[2,128], index: 0, kind: input, shape index: {}]
  %s1 = inlined_call_operand.vmem [shape: f32[128,4], index: 1, kind: input, shape index: {}]
  %s2 = inlined_call_operand.vmem [shape: f32[4,128], index: 2, kind: input, shape index: {}]
  %s3 = inlined_call_operand.vmem [shape: f32[128,32], index: 3, kind: input, shape index: {}]
  %s4 = inlined_call_operand.vmem [shape: f32[32,128], index: 4, kind: input, shape index: {}]
  %s5 = inlined_call_operand.vmem [shape: f32[32,32], index: 5, kind: input, shape index: {}]
  %s6 = inlined_call_operand.vmem [shape: f32[1,32], index: 6, kind: input, shape index: {}]
  %s7 = inlined_call_operand.vmem [shape: f32[1,32], index: 7, kind: input, shape index: {}]
  %s8 = inlined_call_operand.vmem [shape: f32[1,32], index: 8, kind: input, shape index: {}]
  %s9 = inlined_call_operand.vmem [shape: f32[32,32], index: 9, kind: input, shape index: {}]
  %s10 = inlined_call_operand.vmem [shape: f32[1,32], index: 10, kind: input, shape index: {}]
  %s11 = inlined_call_operand.vmem [shape: f32[32,16], index: 11, kind: input, shape index: {}]
  %s12 = inlined_call_operand.vmem [shape: f32[1,16], index: 12, kind: input, shape index: {}]
  %s13 = inlined_call_operand.vmem [shape: f32[16,32], index: 13, kind: input, shape index: {}]
  %s14 = inlined_call_operand.vmem [shape: f32[1,32], index: 14, kind: input, shape index: {}]
  %s15 = inlined_call_operand.vmem [shape: f32[1,32], index: 15, kind: input, shape index: {}]
  %s16 = inlined_call_operand.vmem [shape: f32[1,32], index: 16, kind: input, shape index: {}]
  %s17 = inlined_call_operand.hbm [shape: f32[2,128], index: 17, kind: output, shape index: {}]
  %s18 = sld [smem:[#allocation0]]
  $region78: #{tpu_custom_call.1} parent=0
    _
  %s20 = ssub.s32 1, %s18
  %s21 = scalar_select 0, %s20, %s18
  $region1: #{tpu_custom_call.1} parent=0
    #allocation2 [shape = 'u8[1024]{0}', space=vmem, size = 0x400, scoped, tag = 'output window, operand 0, single buffered']
    #allocation3 [shape = 's32[1]{0}', space=sflag, size = 0x4, scoped, tag = 'scoped memory for tpu_custom_call.1']
    %22 = vsyncpa [#allocation3], 0
    // Predicated region
    $region2: #{tpu_custom_call.1} parent=1 // pred_check
      _
    $region3: #{tpu_custom_call.1} parent=1 // pred_check_branch
      %24 = sbr.rel (0) target = $region5
    $region4: #{tpu_custom_call.1} parent=1 // pred_region
      _
    $region5: #{tpu_custom_call.1} parent=1 // pred_fallthru
      _
    // Predicated region
    $region6: #{tpu_custom_call.1} parent=1 // pred_check
      _
    $region7: #{tpu_custom_call.1} parent=1 // pred_check_branch
      %26 = sbr.rel (0) target = $region9
    $region8: #{tpu_custom_call.1} parent=1 // pred_region
      _
    $region9: #{tpu_custom_call.1} parent=1 // pred_fallthru
      _
    // Predicated region
    $region10: #{tpu_custom_call.1} parent=1 // pred_check
      _
    $region11: #{tpu_custom_call.1} parent=1 // pred_check_branch
      %28 = sbr.rel (0) target = $region13
    $region12: #{tpu_custom_call.1} parent=1 // pred_region
      _
    $region13: #{tpu_custom_call.1} parent=1 // pred_fallthru
      _
    // Predicated region
    $region14: #{tpu_custom_call.1} parent=1 // pred_check
      _
    $region15: #{tpu_custom_call.1} parent=1 // pred_check_branch
      %30 = sbr.rel (0) target = $region17
    $region16: #{tpu_custom_call.1} parent=1 // pred_region
      _
    $region17: #{tpu_custom_call.1} parent=1 // pred_fallthru
      _
    // Predicated region
    $region18: #{tpu_custom_call.1} parent=1 // pred_check
      _
    $region19: #{tpu_custom_call.1} parent=1 // pred_check_branch
      %32 = sbr.rel (0) target = $region21
    $region20: #{tpu_custom_call.1} parent=1 // pred_region
      _
    $region21: #{tpu_custom_call.1} parent=1 // pred_fallthru
      _
    // Predicated region
    $region22: #{tpu_custom_call.1} parent=1 // pred_check
      _
    $region23: #{tpu_custom_call.1} parent=1 // pred_check_branch
      %34 = sbr.rel (0) target = $region25
    $region24: #{tpu_custom_call.1} parent=1 // pred_region
      _
    $region25: #{tpu_custom_call.1} parent=1 // pred_fallthru
      _
    // Predicated region
    $region26: #{tpu_custom_call.1} parent=1 // pred_check
      _
    $region27: #{tpu_custom_call.1} parent=1 // pred_check_branch
      %36 = sbr.rel (0) target = $region29
    $region28: #{tpu_custom_call.1} parent=1 // pred_region
      _
    $region29: #{tpu_custom_call.1} parent=1 // pred_fallthru
      _
    // Predicated region
    $region30: #{tpu_custom_call.1} parent=1 // pred_check
      _
    $region31: #{tpu_custom_call.1} parent=1 // pred_check_branch
      %38 = sbr.rel (0) target = $region33
    $region32: #{tpu_custom_call.1} parent=1 // pred_region
      _
    $region33: #{tpu_custom_call.1} parent=1 // pred_fallthru
      _
    // Predicated region
    $region34: #{tpu_custom_call.1} parent=1 // pred_check
      _
    $region35: #{tpu_custom_call.1} parent=1 // pred_check_branch
      %40 = sbr.rel (0) target = $region37
    $region36: #{tpu_custom_call.1} parent=1 // pred_region
      _
    $region37: #{tpu_custom_call.1} parent=1 // pred_fallthru
      _
    // Predicated region
    $region38: #{tpu_custom_call.1} parent=1 // pred_check
      _
    $region39: #{tpu_custom_call.1} parent=1 // pred_check_branch
      %42 = sbr.rel (0) target = $region41
    $region40: #{tpu_custom_call.1} parent=1 // pred_region
      _
    $region41: #{tpu_custom_call.1} parent=1 // pred_fallthru
      _
    // Predicated region
    $region42: #{tpu_custom_call.1} parent=1 // pred_check
      _
    $region43: #{tpu_custom_call.1} parent=1 // pred_check_branch
      %44 = sbr.rel (0) target = $region45
    $region44: #{tpu_custom_call.1} parent=1 // pred_region
      _
    $region45: #{tpu_custom_call.1} parent=1 // pred_fallthru
      _
    // Predicated region
    $region46: #{tpu_custom_call.1} parent=1 // pred_check
      _
    $region47: #{tpu_custom_call.1} parent=1 // pred_check_branch
      %46 = sbr.rel (0) target = $region49
    $region48: #{tpu_custom_call.1} parent=1 // pred_region
      _
    $region49: #{tpu_custom_call.1} parent=1 // pred_fallthru
      _
    // Predicated region
    $region50: #{tpu_custom_call.1} parent=1 // pred_check
      _
    $region51: #{tpu_custom_call.1} parent=1 // pred_check_branch
      %48 = sbr.rel (0) target = $region53
    $region52: #{tpu_custom_call.1} parent=1 // pred_region
      _
    $region53: #{tpu_custom_call.1} parent=1 // pred_fallthru
      _
    // Predicated region
    $region54: #{tpu_custom_call.1} parent=1 // pred_check
      _
    $region55: #{tpu_custom_call.1} parent=1 // pred_check_branch
      %50 = sbr.rel (0) target = $region57
    $region56: #{tpu_custom_call.1} parent=1 // pred_region
      _
    $region57: #{tpu_custom_call.1} parent=1 // pred_fallthru
      _
    // Predicated region
    $region58: #{tpu_custom_call.1} parent=1 // pred_check
      _
    $region59: #{tpu_custom_call.1} parent=1 // pred_check_branch
      %52 = sbr.rel (0) target = $region61
    $region60: #{tpu_custom_call.1} parent=1 // pred_region
      _
    $region61: #{tpu_custom_call.1} parent=1 // pred_fallthru
      _
    // Predicated region
    $region62: #{tpu_custom_call.1} parent=1 // pred_check
      _
    $region63: #{tpu_custom_call.1} parent=1 // pred_check_branch
      %54 = sbr.rel (0) target = $region65
    $region64: #{tpu_custom_call.1} parent=1 // pred_region
      _
    $region65: #{tpu_custom_call.1} parent=1 // pred_fallthru
      _
    // Predicated region
    $region66: #{tpu_custom_call.1} parent=1 // pred_check
      _
    $region67: #{tpu_custom_call.1} parent=1 // pred_check_branch
      %56 = sbr.rel (0) target = $region69
    $region68: #{tpu_custom_call.1} parent=1 // pred_region
      _
    $region69: #{tpu_custom_call.1} parent=1 // pred_fallthru
      _
    %v57 = vld [vmem:[%s1] sm:$0xff]
    %v58 = vld [vmem:[%s1 + $0x8] sm:$0xff]
    %v59 = vld [vmem:[%s1 + $0x10] sm:$0xff]
    %v60 = vld [vmem:[%s1 + $0x18] sm:$0xff]
    %v61 = vld [vmem:[%s1 + $0x20] sm:$0xff]
    %v62 = vld [vmem:[%s1 + $0x28] sm:$0xff]
    %v63 = vld [vmem:[%s1 + $0x30] sm:$0xff]
    %v64 = vld [vmem:[%s1 + $0x38] sm:$0xff]
    %v65 = vld [vmem:[%s1 + $0x40] sm:$0xff]
    %v66 = vld [vmem:[%s1 + $0x48] sm:$0xff]
    %v67 = vld [vmem:[%s1 + $0x50] sm:$0xff]
    %v68 = vld [vmem:[%s1 + $0x58] sm:$0xff]
    %v69 = vld [vmem:[%s1 + $0x60] sm:$0xff]
    %v70 = vld [vmem:[%s1 + $0x68] sm:$0xff]
    %v71 = vld [vmem:[%s1 + $0x70] sm:$0xff]
    %v72 = vld [vmem:[%s1 + $0x78] sm:$0xff]
    %v73 = vld [vmem:[%s2] sm:$0xf]
    %v74 = vld [vmem:[%s3] sm:$0xff]
    %v75 = vld [vmem:[%s3 + $0x8] sm:$0xff]
    %v76 = vld [vmem:[%s3 + $0x10] sm:$0xff]
    %v77 = vld [vmem:[%s3 + $0x18] sm:$0xff]
    %v78 = vld [vmem:[%s3 + $0x20] sm:$0xff]
    %v79 = vld [vmem:[%s3 + $0x28] sm:$0xff]
    %v80 = vld [vmem:[%s3 + $0x30] sm:$0xff]
    %v81 = vld [vmem:[%s3 + $0x38] sm:$0xff]
    %v82 = vld [vmem:[%s3 + $0x40] sm:$0xff]
    %v83 = vld [vmem:[%s3 + $0x48] sm:$0xff]
    %v84 = vld [vmem:[%s3 + $0x50] sm:$0xff]
    %v85 = vld [vmem:[%s3 + $0x58] sm:$0xff]
    %v86 = vld [vmem:[%s3 + $0x60] sm:$0xff]
    %v87 = vld [vmem:[%s3 + $0x68] sm:$0xff]
    %v88 = vld [vmem:[%s3 + $0x70] sm:$0xff]
    %v89 = vld [vmem:[%s3 + $0x78] sm:$0xff]
    %v90 = vld [vmem:[%s4] sm:$0xff]
    %v91 = vld [vmem:[%s4 + $0x8] sm:$0xff]
    %v92 = vld [vmem:[%s4 + $0x10] sm:$0xff]
    %v93 = vld [vmem:[%s4 + $0x18] sm:$0xff]
    %v94 = vld [vmem:[%s0] sm:$0x3]
    %vm95 = vcmask 1041408
    %v96 = vsel %vm95, %v94, 0.0
    %v97 = vrot.slane %v96, 4
    %v98 = vadd.f32 %v96, %v97
    %v99 = vrot.slane %v98, 2
    %v100 = vadd.f32 %v98, %v99
    %v101 = vrot.slane %v100, 1
    %v102 = vadd.f32 %v100, %v101
    %v103 = vpack.c.bf16 %v102, %v102
    %v104 = vunpack.c.l.bf16 %v103
    %v105 = vsub.f32 %v102, %v104
    %v106 = vpack.c.bf16 %v74, %v74
    %v107 = vpack.c.bf16 %v75, %v75
    %v108 = vpack.c.bf16 %v76, %v76
    %v109 = vpack.c.bf16 %v77, %v77
    %v110 = vpack.c.bf16 %v78, %v78
    %v111 = vpack.c.bf16 %v79, %v79
    %v112 = vpack.c.bf16 %v80, %v80
    %v113 = vpack.c.bf16 %v81, %v81
    %v114 = vpack.c.bf16 %v82, %v82
    %v115 = vpack.c.bf16 %v83, %v83
    %v116 = vpack.c.bf16 %v84, %v84
    %v117 = vpack.c.bf16 %v85, %v85
    %v118 = vpack.c.bf16 %v86, %v86
    %v119 = vpack.c.bf16 %v87, %v87
    %v120 = vpack.c.bf16 %v88, %v88
    %v121 = vpack.c.bf16 %v89, %v89
    %v122 = vunpack.c.l.bf16 %v106
    %v123 = vunpack.c.l.bf16 %v107
    %v124 = vunpack.c.l.bf16 %v108
    %v125 = vunpack.c.l.bf16 %v109
    %v126 = vunpack.c.l.bf16 %v110
    %v127 = vunpack.c.l.bf16 %v111
    %v128 = vunpack.c.l.bf16 %v112
    %v129 = vunpack.c.l.bf16 %v113
    %v130 = vunpack.c.l.bf16 %v114
    %v131 = vunpack.c.l.bf16 %v115
    %v132 = vunpack.c.l.bf16 %v116
    %v133 = vunpack.c.l.bf16 %v117
    %v134 = vunpack.c.l.bf16 %v118
    %v135 = vunpack.c.l.bf16 %v119
    %v136 = vunpack.c.l.bf16 %v120
    %v137 = vunpack.c.l.bf16 %v121
    %v138 = vsub.f32 %v74, %v122
    %v139 = vsub.f32 %v75, %v123
    %v140 = vsub.f32 %v76, %v124
    %v141 = vsub.f32 %v77, %v125
    %v142 = vsub.f32 %v78, %v126
    %v143 = vsub.f32 %v79, %v127
    %v144 = vsub.f32 %v80, %v128
    %v145 = vsub.f32 %v81, %v129
    %v146 = vsub.f32 %v82, %v130
    %v147 = vsub.f32 %v83, %v131
    %v148 = vsub.f32 %v84, %v132
    %v149 = vsub.f32 %v85, %v133
    %v150 = vsub.f32 %v86, %v134
    %v151 = vsub.f32 %v87, %v135
    %v152 = vsub.f32 %v88, %v136
    %v153 = vsub.f32 %v89, %v137
    %154 = vmatpush.msra.mxu0 %v137
    %155 = vmatpush.msra.mxu0 %v136
    %156 = vmatpush.msra.mxu0 %v135
    %157 = vmatpush.msra.mxu0 %v134
    %158 = vmatpush.msra.mxu0 %v133
    %159 = vmatpush.msra.mxu0 %v132
    %160 = vmatpush.msra.mxu0 %v131
    %161 = vmatpush.msra.mxu0 %v130
    %162 = vmatpush.msra.mxu0 %v129
    %163 = vmatpush.msra.mxu0 %v128
    %164 = vmatpush.msra.mxu0 %v127
    %165 = vmatpush.msra.mxu0 %v126
    %166 = vmatpush.msra.mxu0 %v125
    %167 = vmatpush.msra.mxu0 %v124
    %168 = vmatpush.msra.mxu0 %v123
    %169 = vmatpush.msra.mxu0 %v122
    %170 = vmatmul.f32.gmra.mxu0 %v105
    %v171 = vpop.f32.mrf.mxu0
    %v172 = vadd.f32 0.0, %v171
    %173 = vdwg.mxu0
    %174 = vmatpush.msra.mxu0 %v137
    %175 = vmatpush.msra.mxu0 %v136
    %176 = vmatpush.msra.mxu0 %v135
    %177 = vmatpush.msra.mxu0 %v134
    %178 = vmatpush.msra.mxu0 %v133
    %179 = vmatpush.msra.mxu0 %v132
    %180 = vmatpush.msra.mxu0 %v131
    %181 = vmatpush.msra.mxu0 %v130
    %182 = vmatpush.msra.mxu0 %v129
    %183 = vmatpush.msra.mxu0 %v128
    %184 = vmatpush.msra.mxu0 %v127
    %185 = vmatpush.msra.mxu0 %v126
    %186 = vmatpush.msra.mxu0 %v125
    %187 = vmatpush.msra.mxu0 %v124
    %188 = vmatpush.msra.mxu0 %v123
    %189 = vmatpush.msra.mxu0 %v122
    %190 = vmatmul.f32.gmra.mxu0 %v104
    %v191 = vpop.f32.mrf.mxu0
    %v192 = vadd.f32 %v172, %v191
    %193 = vdwg.mxu0
    %194 = vmatpush.msra.mxu0 %v153
    %195 = vmatpush.msra.mxu0 %v152
    %196 = vmatpush.msra.mxu0 %v151
    %197 = vmatpush.msra.mxu0 %v150
    %198 = vmatpush.msra.mxu0 %v149
    %199 = vmatpush.msra.mxu0 %v148
    %200 = vmatpush.msra.mxu0 %v147
    %201 = vmatpush.msra.mxu0 %v146
    %202 = vmatpush.msra.mxu0 %v145
    %203 = vmatpush.msra.mxu0 %v144
    %204 = vmatpush.msra.mxu0 %v143
    %205 = vmatpush.msra.mxu0 %v142
    %206 = vmatpush.msra.mxu0 %v141
    %207 = vmatpush.msra.mxu0 %v140
    %208 = vmatpush.msra.mxu0 %v139
    %209 = vmatpush.msra.mxu0 %v138
    %210 = vmatmul.f32.gmra.mxu0 %v104
    %v211 = vpop.f32.mrf.mxu0
    %v212 = vadd.f32 0.0, %v211
    %213 = vdwg.mxu0
    %v214 = vadd.f32 %v192, %v212
    %v215 = vmul.f32 %v214, 0.125
    %v216 = vld [vmem:[%s5] sm:$0xff]
    %v217 = vld [vmem:[%s5 + $0x8] sm:$0xff]
    %v218 = vld [vmem:[%s5 + $0x10] sm:$0xff]
    %v219 = vld [vmem:[%s5 + $0x18] sm:$0xff]
    %v220 = vld [vmem:[%s6] sm:$0x1]
    %v221 = vld [vmem:[%s7] sm:$0x1]
    %v222 = vld [vmem:[%s8] sm:$0x1]
    %v223 = vld [vmem:[%s9] sm:$0xff]
    %v224 = vld [vmem:[%s9 + $0x8] sm:$0xff]
    %v225 = vld [vmem:[%s9 + $0x10] sm:$0xff]
    %v226 = vld [vmem:[%s9 + $0x18] sm:$0xff]
    %v227 = vld [vmem:[%s10] sm:$0x1]
    %v228 = vld [vmem:[%s11] sm:$0xff]
    %v229 = vld [vmem:[%s11 + $0x8] sm:$0xff]
    %v230 = vld [vmem:[%s11 + $0x10] sm:$0xff]
    %v231 = vld [vmem:[%s11 + $0x18] sm:$0xff]
    %v232 = vld [vmem:[%s12] sm:$0x1]
    %v233 = vld [vmem:[%s13] sm:$0xff]
    %v234 = vld [vmem:[%s13 + $0x8] sm:$0xff]
    %v235 = vld [vmem:[%s14] sm:$0x1]
    %v236 = vld [vmem:[%s15] sm:$0x1]
    %v237 = vld [vmem:[%s16] sm:$0x1]
    %v238 = vpack.c.bf16 %v215, %v215
    %v239 = vunpack.c.l.bf16 %v238
    %v240 = vsub.f32 %v215, %v239
    %v241 = vpack.c.bf16 %v216, %v216
    %v242 = vpack.c.bf16 %v217, %v217
    %v243 = vpack.c.bf16 %v218, %v218
    %v244 = vpack.c.bf16 %v219, %v219
    %v245 = vunpack.c.l.bf16 %v241
    %v246 = vunpack.c.l.bf16 %v242
    %v247 = vunpack.c.l.bf16 %v243
    %v248 = vunpack.c.l.bf16 %v244
    %v249 = vsub.f32 %v216, %v245
    %v250 = vsub.f32 %v217, %v246
    %v251 = vsub.f32 %v218, %v247
    %v252 = vsub.f32 %v219, %v248
    %vm253 = vcmask 261120
    %v255 = vsel %vm253, %v240, 0
    %257 = vmatpush.msra.mxu0 0.0
    %258 = vmatpush.msra.mxu0 0.0
    %259 = vmatpush.msra.mxu0 0.0
    %260 = vmatpush.msra.mxu0 0.0
    %261 = vmatpush.msra.mxu0 0.0
    %262 = vmatpush.msra.mxu0 0.0
    %263 = vmatpush.msra.mxu0 0.0
    %264 = vmatpush.msra.mxu0 0.0
    %265 = vmatpush.msra.mxu0 0.0
    %266 = vmatpush.msra.mxu0 0.0
    %267 = vmatpush.msra.mxu0 0.0
    %268 = vmatpush.msra.mxu0 0.0
    %269 = vmatpush.msra.mxu0 %v248
    %270 = vmatpush.msra.mxu0 %v247
    %271 = vmatpush.msra.mxu0 %v246
    %272 = vmatpush.msra.mxu0 %v245
    %273 = vmatmul.f32.gmra.mxu0 %v255
    %v274 = vpop.f32.mrf.mxu0
    %v275 = vadd.f32 0.0, %v274
    %276 = vdwg.mxu0
    %v278 = vsel %vm253, %v239, 0
    %280 = vmatpush.msra.mxu0 0.0
    %281 = vmatpush.msra.mxu0 0.0
    %282 = vmatpush.msra.mxu0 0.0
    %283 = vmatpush.msra.mxu0 0.0
    %284 = vmatpush.msra.mxu0 0.0
    %285 = vmatpush.msra.mxu0 0.0
    %286 = vmatpush.msra.mxu0 0.0
    %287 = vmatpush.msra.mxu0 0.0
    %288 = vmatpush.msra.mxu0 0.0
    %289 = vmatpush.msra.mxu0 0.0
    %290 = vmatpush.msra.mxu0 0.0
    %291 = vmatpush.msra.mxu0 0.0
    %292 = vmatpush.msra.mxu0 %v248
    %293 = vmatpush.msra.mxu0 %v247
    %294 = vmatpush.msra.mxu0 %v246
    %295 = vmatpush.msra.mxu0 %v245
    %296 = vmatmul.f32.gmra.mxu0 %v278
    %v297 = vpop.f32.mrf.mxu0
    %v298 = vadd.f32 %v275, %v297
    %299 = vdwg.mxu0
    %300 = vmatpush.msra.mxu0 0.0
    %301 = vmatpush.msra.mxu0 0.0
    %302 = vmatpush.msra.mxu0 0.0
    %303 = vmatpush.msra.mxu0 0.0
    %304 = vmatpush.msra.mxu0 0.0
    %305 = vmatpush.msra.mxu0 0.0
    %306 = vmatpush.msra.mxu0 0.0
    %307 = vmatpush.msra.mxu0 0.0
    %308 = vmatpush.msra.mxu0 0.0
    %309 = vmatpush.msra.mxu0 0.0
    %310 = vmatpush.msra.mxu0 0.0
    %311 = vmatpush.msra.mxu0 0.0
    %312 = vmatpush.msra.mxu0 %v252
    %313 = vmatpush.msra.mxu0 %v251
    %314 = vmatpush.msra.mxu0 %v250
    %315 = vmatpush.msra.mxu0 %v249
    %316 = vmatmul.f32.gmra.mxu0 %v278
    %v317 = vpop.f32.mrf.mxu0
    %v318 = vadd.f32 0.0, %v317
    %319 = vdwg.mxu0
    %v320 = vadd.f32 %v298, %v318
    %v321 = vadd.f32 %v320, %v220
    %vm322 = vcmask 253952
    %v323 = vsel %vm322, %v321, 0.0
    %324 = vadd.xlane.f32.xlu0 %v323
    %v325 = vpop.xlane.xlu0 %324
    %v326 = vrcp.pop 32.0
    %v327 = vmul.f32 32.0, %v326
    %v328 = vsub.f32 1.0, %v327
    %v329 = vmul.f32 %v326, %v328
    %v330 = vadd.f32 %v326, %v329
    %vm331 = vweird.f32 %v326
    %v332 = vsel %vm331, %v326, %v330
    %v333 = vmul.f32 %v325, %v332
    %v334 = vsub.f32 %v321, %v333
    %v335 = vmul.f32 %v334, %v334
    %v336 = vsel %vm322, %v335, 0.0
    %337 = vadd.xlane.f32.xlu0 %v336
    %v338 = vpop.xlane.xlu0 %337
    %v339 = vmul.f32 %v338, %v332
    %v340 = vadd.f32 %v339, 1e-05
    %v341 = vrsqrt.pop %v340
    %v342 = vmul.f32 %v341, %v340
    %v343 = vmul.f32 %v342, %v341
    %v344 = vmul.f32 0.5, %v343
    %v345 = vsub.f32 1.5, %v344
    %v346 = vmul.f32 %v341, %v345
    %vm347 = vweird.f32 %v340
    %vm348 = vweird.f32 %v341
    %vm349 = vmor %vm347, %vm348
    %v350 = vsel %vm349, %v341, %v346
    %v351 = vmul.f32 %v334, %v350
    %v352 = vmul.f32 %v351, %v221
    %v353 = vadd.f32 %v352, %v222
    %v354 = vmax.f32 %v353, 0.0
    %v355 = vpack.c.bf16 %v354, %v354
    %v356 = vunpack.c.l.bf16 %v355
    %v357 = vsub.f32 %v354, %v356
    %v358 = vpack.c.bf16 %v223, %v223
    %v359 = vpack.c.bf16 %v224, %v224
    %v360 = vpack.c.bf16 %v225, %v225
    %v361 = vpack.c.bf16 %v226, %v226
    %v362 = vunpack.c.l.bf16 %v358
    %v363 = vunpack.c.l.bf16 %v359
    %v364 = vunpack.c.l.bf16 %v360
    %v365 = vunpack.c.l.bf16 %v361
    %v366 = vsub.f32 %v223, %v362
    %v367 = vsub.f32 %v224, %v363
    %v368 = vsub.f32 %v225, %v364
    %v369 = vsub.f32 %v226, %v365
    %v371 = vsel %vm253, %v357, 0
    %373 = vmatpush.msra.mxu0 0.0
    %374 = vmatpush.msra.mxu0 0.0
    %375 = vmatpush.msra.mxu0 0.0
    %376 = vmatpush.msra.mxu0 0.0
    %377 = vmatpush.msra.mxu0 0.0
    %378 = vmatpush.msra.mxu0 0.0
    %379 = vmatpush.msra.mxu0 0.0
    %380 = vmatpush.msra.mxu0 0.0
    %381 = vmatpush.msra.mxu0 0.0
    %382 = vmatpush.msra.mxu0 0.0
    %383 = vmatpush.msra.mxu0 0.0
    %384 = vmatpush.msra.mxu0 0.0
    %385 = vmatpush.msra.mxu0 %v365
    %386 = vmatpush.msra.mxu0 %v364
    %387 = vmatpush.msra.mxu0 %v363
    %388 = vmatpush.msra.mxu0 %v362
    %389 = vmatmul.f32.gmra.mxu0 %v371
    %v390 = vpop.f32.mrf.mxu0
    %v391 = vadd.f32 0.0, %v390
    %392 = vdwg.mxu0
    %v394 = vsel %vm253, %v356, 0
    %396 = vmatpush.msra.mxu0 0.0
    %397 = vmatpush.msra.mxu0 0.0
    %398 = vmatpush.msra.mxu0 0.0
    %399 = vmatpush.msra.mxu0 0.0
    %400 = vmatpush.msra.mxu0 0.0
    %401 = vmatpush.msra.mxu0 0.0
    %402 = vmatpush.msra.mxu0 0.0
    %403 = vmatpush.msra.mxu0 0.0
    %404 = vmatpush.msra.mxu0 0.0
    %405 = vmatpush.msra.mxu0 0.0
    %406 = vmatpush.msra.mxu0 0.0
    %407 = vmatpush.msra.mxu0 0.0
    %408 = vmatpush.msra.mxu0 %v365
    %409 = vmatpush.msra.mxu0 %v364
    %410 = vmatpush.msra.mxu0 %v363
    %411 = vmatpush.msra.mxu0 %v362
    %412 = vmatmul.f32.gmra.mxu0 %v394
    %v413 = vpop.f32.mrf.mxu0
    %v414 = vadd.f32 %v391, %v413
    %415 = vdwg.mxu0
    %416 = vmatpush.msra.mxu0 0.0
    %417 = vmatpush.msra.mxu0 0.0
    %418 = vmatpush.msra.mxu0 0.0
    %419 = vmatpush.msra.mxu0 0.0
    %420 = vmatpush.msra.mxu0 0.0
    %421 = vmatpush.msra.mxu0 0.0
    %422 = vmatpush.msra.mxu0 0.0
    %423 = vmatpush.msra.mxu0 0.0
    %424 = vmatpush.msra.mxu0 0.0
    %425 = vmatpush.msra.mxu0 0.0
    %426 = vmatpush.msra.mxu0 0.0
    %427 = vmatpush.msra.mxu0 0.0
    %428 = vmatpush.msra.mxu0 %v369
    %429 = vmatpush.msra.mxu0 %v368
    %430 = vmatpush.msra.mxu0 %v367
    %431 = vmatpush.msra.mxu0 %v366
    %432 = vmatmul.f32.gmra.mxu0 %v394
    %v433 = vpop.f32.mrf.mxu0
    %v434 = vadd.f32 0.0, %v433
    %435 = vdwg.mxu0
    %v436 = vadd.f32 %v414, %v434
    %v437 = vadd.f32 %v436, %v227
    %v438 = vxor.u32 %v437, 2147483648
    %v439 = vmul.f32 %v438, 1.442695
    %v440 = vpow.pop %v439
    %v441 = vadd.f32 %v440, 1.0
    %v442 = vrcp.pop %v441
    %v443 = vmul.f32 %v441, %v442
    %v444 = vsub.f32 1.0, %v443
    %v445 = vmul.f32 %v442, %v444
    %v446 = vadd.f32 %v442, %v445
    %vm447 = vweird.f32 %v441
    %vm448 = vweird.f32 %v442
    %vm449 = vmor %vm447, %vm448
    %v450 = vsel %vm449, %v442, %v446
    %v451 = vand.u32 2147483647, %v441
    %vm452 = vcmp.eq.f32.partialorder %v451, 8.507059e+37
    %v453 = vand.u32 %v441, 2147483648
    %v454 = vor.u32 1.1754944e-38, %v453
    %v455 = vsel %vm452, %v454, %v450
    %v456 = vmul.f32 1.0, %v455
    %v457 = vmul.f32 %v456, %v236
    %v458 = vadd.f32 %v457, 1.0
    %v459 = vpack.c.bf16 %v228, %v228
    %v460 = vpack.c.bf16 %v229, %v229
    %v461 = vpack.c.bf16 %v230, %v230
    %v462 = vpack.c.bf16 %v231, %v231
    %v463 = vunpack.c.l.bf16 %v459
    %v464 = vunpack.c.l.bf16 %v460
    %v465 = vunpack.c.l.bf16 %v461
    %v466 = vunpack.c.l.bf16 %v462
    %v467 = vsub.f32 %v228, %v463
    %v468 = vsub.f32 %v229, %v464
    %v469 = vsub.f32 %v230, %v465
    %v470 = vsub.f32 %v231, %v466
    %471 = vmatpush.msra.mxu0 0.0
    %472 = vmatpush.msra.mxu0 0.0
    %473 = vmatpush.msra.mxu0 0.0
    %474 = vmatpush.msra.mxu0 0.0
    %475 = vmatpush.msra.mxu0 0.0
    %476 = vmatpush.msra.mxu0 0.0
    %477 = vmatpush.msra.mxu0 0.0
    %478 = vmatpush.msra.mxu0 0.0
    %479 = vmatpush.msra.mxu0 0.0
    %480 = vmatpush.msra.mxu0 0.0
    %481 = vmatpush.msra.mxu0 0.0
    %482 = vmatpush.msra.mxu0 0.0
    %483 = vmatpush.msra.mxu0 %v466
    %484 = vmatpush.msra.mxu0 %v465
    %485 = vmatpush.msra.mxu0 %v464
    %486 = vmatpush.msra.mxu0 %v463
    %487 = vmatmul.f32.gmra.mxu0 %v255
    %v488 = vpop.f32.mrf.mxu0
    %v489 = vadd.f32 0.0, %v488
    %490 = vdwg.mxu0
    %491 = vmatpush.msra.mxu0 0.0
    %492 = vmatpush.msra.mxu0 0.0
    %493 = vmatpush.msra.mxu0 0.0
    %494 = vmatpush.msra.mxu0 0.0
    %495 = vmatpush.msra.mxu0 0.0
    %496 = vmatpush.msra.mxu0 0.0
    %497 = vmatpush.msra.mxu0 0.0
    %498 = vmatpush.msra.mxu0 0.0
    %499 = vmatpush.msra.mxu0 0.0
    %500 = vmatpush.msra.mxu0 0.0
    %501 = vmatpush.msra.mxu0 0.0
    %502 = vmatpush.msra.mxu0 0.0
    %503 = vmatpush.msra.mxu0 %v466
    %504 = vmatpush.msra.mxu0 %v465
    %505 = vmatpush.msra.mxu0 %v464
    %506 = vmatpush.msra.mxu0 %v463
    %507 = vmatmul.f32.gmra.mxu0 %v278
    %v508 = vpop.f32.mrf.mxu0
    %v509 = vadd.f32 %v489, %v508
    %510 = vdwg.mxu0
    %511 = vmatpush.msra.mxu0 0.0
    %512 = vmatpush.msra.mxu0 0.0
    %513 = vmatpush.msra.mxu0 0.0
    %514 = vmatpush.msra.mxu0 0.0
    %515 = vmatpush.msra.mxu0 0.0
    %516 = vmatpush.msra.mxu0 0.0
    %517 = vmatpush.msra.mxu0 0.0
    %518 = vmatpush.msra.mxu0 0.0
    %519 = vmatpush.msra.mxu0 0.0
    %520 = vmatpush.msra.mxu0 0.0
    %521 = vmatpush.msra.mxu0 0.0
    %522 = vmatpush.msra.mxu0 0.0
    %523 = vmatpush.msra.mxu0 %v470
    %524 = vmatpush.msra.mxu0 %v469
    %525 = vmatpush.msra.mxu0 %v468
    %526 = vmatpush.msra.mxu0 %v467
    %527 = vmatmul.f32.gmra.mxu0 %v278
    %v528 = vpop.f32.mrf.mxu0
    %v529 = vadd.f32 0.0, %v528
    %530 = vdwg.mxu0
    %v531 = vadd.f32 %v509, %v529
    %v532 = vadd.f32 %v531, %v232
    %v533 = vmax.f32 %v532, 0.0
    %v534 = vpack.c.bf16 %v533, %v533
    %v535 = vunpack.c.l.bf16 %v534
    %v536 = vsub.f32 %v533, %v535
    %v537 = vpack.c.bf16 %v233, %v233
    %v538 = vpack.c.bf16 %v234, %v234
    %v539 = vunpack.c.l.bf16 %v537
    %v540 = vunpack.c.l.bf16 %v538
    %v541 = vsub.f32 %v233, %v539
    %v542 = vsub.f32 %v234, %v540
    %vm543 = vcmask 130048
    %v545 = vsel %vm543, %v536, 0
    %547 = vmatpush.msra.mxu0 0.0
    %548 = vmatpush.msra.mxu0 0.0
    %549 = vmatpush.msra.mxu0 0.0
    %550 = vmatpush.msra.mxu0 0.0
    %551 = vmatpush.msra.mxu0 0.0
    %552 = vmatpush.msra.mxu0 0.0
    %553 = vmatpush.msra.mxu0 0.0
    %554 = vmatpush.msra.mxu0 0.0
    %555 = vmatpush.msra.mxu0 0.0
    %556 = vmatpush.msra.mxu0 0.0
    %557 = vmatpush.msra.mxu0 0.0
    %558 = vmatpush.msra.mxu0 0.0
    %559 = vmatpush.msra.mxu0 0.0
    %560 = vmatpush.msra.mxu0 0.0
    %561 = vmatpush.msra.mxu0 %v540
    %562 = vmatpush.msra.mxu0 %v539
    %563 = vmatmul.f32.gmra.mxu0 %v545
    %v564 = vpop.f32.mrf.mxu0
    %v565 = vadd.f32 0.0, %v564
    %566 = vdwg.mxu0
    %v568 = vsel %vm543, %v535, 0
    %570 = vmatpush.msra.mxu0 0.0
    %571 = vmatpush.msra.mxu0 0.0
    %572 = vmatpush.msra.mxu0 0.0
    %573 = vmatpush.msra.mxu0 0.0
    %574 = vmatpush.msra.mxu0 0.0
    %575 = vmatpush.msra.mxu0 0.0
    %576 = vmatpush.msra.mxu0 0.0
    %577 = vmatpush.msra.mxu0 0.0
    %578 = vmatpush.msra.mxu0 0.0
    %579 = vmatpush.msra.mxu0 0.0
    %580 = vmatpush.msra.mxu0 0.0
    %581 = vmatpush.msra.mxu0 0.0
    %582 = vmatpush.msra.mxu0 0.0
    %583 = vmatpush.msra.mxu0 0.0
    %584 = vmatpush.msra.mxu0 %v540
    %585 = vmatpush.msra.mxu0 %v539
    %586 = vmatmul.f32.gmra.mxu0 %v568
    %v587 = vpop.f32.mrf.mxu0
    %v588 = vadd.f32 %v565, %v587
    %589 = vdwg.mxu0
    %590 = vmatpush.msra.mxu0 0.0
    %591 = vmatpush.msra.mxu0 0.0
    %592 = vmatpush.msra.mxu0 0.0
    %593 = vmatpush.msra.mxu0 0.0
    %594 = vmatpush.msra.mxu0 0.0
    %595 = vmatpush.msra.mxu0 0.0
    %596 = vmatpush.msra.mxu0 0.0
    %597 = vmatpush.msra.mxu0 0.0
    %598 = vmatpush.msra.mxu0 0.0
    %599 = vmatpush.msra.mxu0 0.0
    %600 = vmatpush.msra.mxu0 0.0
    %601 = vmatpush.msra.mxu0 0.0
    %602 = vmatpush.msra.mxu0 0.0
    %603 = vmatpush.msra.mxu0 0.0
    %604 = vmatpush.msra.mxu0 %v542
    %605 = vmatpush.msra.mxu0 %v541
    %606 = vmatmul.f32.gmra.mxu0 %v568
    %v607 = vpop.f32.mrf.mxu0
    %v608 = vadd.f32 0.0, %v607
    %609 = vdwg.mxu0
    %v610 = vadd.f32 %v588, %v608
    %v611 = vadd.f32 %v610, %v235
    %v612 = vmul.f32 %v611, %v237
    %v613 = vpack.c.bf16 %v458, %v458
    %v614 = vunpack.c.l.bf16 %v613
    %v615 = vsub.f32 %v458, %v614
    %v616 = vpack.c.bf16 %v90, %v90
    %v617 = vpack.c.bf16 %v91, %v91
    %v618 = vpack.c.bf16 %v92, %v92
    %v619 = vpack.c.bf16 %v93, %v93
    %v620 = vunpack.c.l.bf16 %v616
    %v621 = vunpack.c.l.bf16 %v617
    %v622 = vunpack.c.l.bf16 %v618
    %v623 = vunpack.c.l.bf16 %v619
    %v624 = vsub.f32 %v90, %v620
    %v625 = vsub.f32 %v91, %v621
    %v626 = vsub.f32 %v92, %v622
    %v627 = vsub.f32 %v93, %v623
    %v629 = vsel %vm253, %v615, 0
    %631 = vmatpush.msra.mxu0 0.0
    %632 = vmatpush.msra.mxu0 0.0
    %633 = vmatpush.msra.mxu0 0.0
    %634 = vmatpush.msra.mxu0 0.0
    %635 = vmatpush.msra.mxu0 0.0
    %636 = vmatpush.msra.mxu0 0.0
    %637 = vmatpush.msra.mxu0 0.0
    %638 = vmatpush.msra.mxu0 0.0
    %639 = vmatpush.msra.mxu0 0.0
    %640 = vmatpush.msra.mxu0 0.0
    %641 = vmatpush.msra.mxu0 0.0
    %642 = vmatpush.msra.mxu0 0.0
    %643 = vmatpush.msra.mxu0 %v623
    %644 = vmatpush.msra.mxu0 %v622
    %645 = vmatpush.msra.mxu0 %v621
    %646 = vmatpush.msra.mxu0 %v620
    %647 = vmatmul.f32.gmra.mxu0 %v629
    %v648 = vpop.f32.mrf.mxu0
    %v649 = vadd.f32 0.0, %v648
    %650 = vdwg.mxu0
    %v652 = vsel %vm253, %v614, 0
    %654 = vmatpush.msra.mxu0 0.0
    %655 = vmatpush.msra.mxu0 0.0
    %656 = vmatpush.msra.mxu0 0.0
    %657 = vmatpush.msra.mxu0 0.0
    %658 = vmatpush.msra.mxu0 0.0
    %659 = vmatpush.msra.mxu0 0.0
    %660 = vmatpush.msra.mxu0 0.0
    %661 = vmatpush.msra.mxu0 0.0
    %662 = vmatpush.msra.mxu0 0.0
    %663 = vmatpush.msra.mxu0 0.0
    %664 = vmatpush.msra.mxu0 0.0
    %665 = vmatpush.msra.mxu0 0.0
    %666 = vmatpush.msra.mxu0 %v623
    %667 = vmatpush.msra.mxu0 %v622
    %668 = vmatpush.msra.mxu0 %v621
    %669 = vmatpush.msra.mxu0 %v620
    %670 = vmatmul.f32.gmra.mxu0 %v652
    %v671 = vpop.f32.mrf.mxu0
    %v672 = vadd.f32 %v649, %v671
    %673 = vdwg.mxu0
    %674 = vmatpush.msra.mxu0 0.0
    %675 = vmatpush.msra.mxu0 0.0
    %676 = vmatpush.msra.mxu0 0.0
    %677 = vmatpush.msra.mxu0 0.0
    %678 = vmatpush.msra.mxu0 0.0
    %679 = vmatpush.msra.mxu0 0.0
    %680 = vmatpush.msra.mxu0 0.0
    %681 = vmatpush.msra.mxu0 0.0
    %682 = vmatpush.msra.mxu0 0.0
    %683 = vmatpush.msra.mxu0 0.0
    %684 = vmatpush.msra.mxu0 0.0
    %685 = vmatpush.msra.mxu0 0.0
    %686 = vmatpush.msra.mxu0 %v627
    %687 = vmatpush.msra.mxu0 %v626
    %688 = vmatpush.msra.mxu0 %v625
    %689 = vmatpush.msra.mxu0 %v624
    %690 = vmatmul.f32.gmra.mxu0 %v652
    %v691 = vpop.f32.mrf.mxu0
    %v692 = vadd.f32 0.0, %v691
    %693 = vdwg.mxu0
    %v694 = vadd.f32 %v672, %v692
    %v695 = vpack.c.bf16 %v612, %v612
    %v696 = vunpack.c.l.bf16 %v695
    %v697 = vsub.f32 %v612, %v696
    %v699 = vsel %vm253, %v697, 0
    %701 = vmatpush.msra.mxu0 0.0
    %702 = vmatpush.msra.mxu0 0.0
    %703 = vmatpush.msra.mxu0 0.0
    %704 = vmatpush.msra.mxu0 0.0
    %705 = vmatpush.msra.mxu0 0.0
    %706 = vmatpush.msra.mxu0 0.0
    %707 = vmatpush.msra.mxu0 0.0
    %708 = vmatpush.msra.mxu0 0.0
    %709 = vmatpush.msra.mxu0 0.0
    %710 = vmatpush.msra.mxu0 0.0
    %711 = vmatpush.msra.mxu0 0.0
    %712 = vmatpush.msra.mxu0 0.0
    %713 = vmatpush.msra.mxu0 %v623
    %714 = vmatpush.msra.mxu0 %v622
    %715 = vmatpush.msra.mxu0 %v621
    %716 = vmatpush.msra.mxu0 %v620
    %717 = vmatmul.f32.gmra.mxu0 %v699
    %v718 = vpop.f32.mrf.mxu0
    %v719 = vadd.f32 0.0, %v718
    %720 = vdwg.mxu0
    %v722 = vsel %vm253, %v696, 0
    %724 = vmatpush.msra.mxu0 0.0
    %725 = vmatpush.msra.mxu0 0.0
    %726 = vmatpush.msra.mxu0 0.0
    %727 = vmatpush.msra.mxu0 0.0
    %728 = vmatpush.msra.mxu0 0.0
    %729 = vmatpush.msra.mxu0 0.0
    %730 = vmatpush.msra.mxu0 0.0
    %731 = vmatpush.msra.mxu0 0.0
    %732 = vmatpush.msra.mxu0 0.0
    %733 = vmatpush.msra.mxu0 0.0
    %734 = vmatpush.msra.mxu0 0.0
    %735 = vmatpush.msra.mxu0 0.0
    %736 = vmatpush.msra.mxu0 %v623
    %737 = vmatpush.msra.mxu0 %v622
    %738 = vmatpush.msra.mxu0 %v621
    %739 = vmatpush.msra.mxu0 %v620
    %740 = vmatmul.f32.gmra.mxu0 %v722
    %v741 = vpop.f32.mrf.mxu0
    %v742 = vadd.f32 %v719, %v741
    %743 = vdwg.mxu0
    %744 = vmatpush.msra.mxu0 0.0
    %745 = vmatpush.msra.mxu0 0.0
    %746 = vmatpush.msra.mxu0 0.0
    %747 = vmatpush.msra.mxu0 0.0
    %748 = vmatpush.msra.mxu0 0.0
    %749 = vmatpush.msra.mxu0 0.0
    %750 = vmatpush.msra.mxu0 0.0
    %751 = vmatpush.msra.mxu0 0.0
    %752 = vmatpush.msra.mxu0 0.0
    %753 = vmatpush.msra.mxu0 0.0
    %754 = vmatpush.msra.mxu0 0.0
    %755 = vmatpush.msra.mxu0 0.0
    %756 = vmatpush.msra.mxu0 %v627
    %757 = vmatpush.msra.mxu0 %v626
    %758 = vmatpush.msra.mxu0 %v625
    %759 = vmatpush.msra.mxu0 %v624
    %760 = vmatmul.f32.gmra.mxu0 %v722
    %v761 = vpop.f32.mrf.mxu0
    %v762 = vadd.f32 0.0, %v761
    %763 = vdwg.mxu0
    %v764 = vadd.f32 %v742, %v762
    %v765 = vpack.c.bf16 %v94, %v94
    %v766 = vunpack.c.l.bf16 %v765
    %v767 = vsub.f32 %v94, %v766
    %v768 = vpack.c.bf16 %v57, %v57
    %v769 = vpack.c.bf16 %v58, %v58
    %v770 = vpack.c.bf16 %v59, %v59
    %v771 = vpack.c.bf16 %v60, %v60
    %v772 = vpack.c.bf16 %v61, %v61
    %v773 = vpack.c.bf16 %v62, %v62
    %v774 = vpack.c.bf16 %v63, %v63
    %v775 = vpack.c.bf16 %v64, %v64
    %v776 = vpack.c.bf16 %v65, %v65
    %v777 = vpack.c.bf16 %v66, %v66
    %v778 = vpack.c.bf16 %v67, %v67
    %v779 = vpack.c.bf16 %v68, %v68
    %v780 = vpack.c.bf16 %v69, %v69
    %v781 = vpack.c.bf16 %v70, %v70
    %v782 = vpack.c.bf16 %v71, %v71
    %v783 = vpack.c.bf16 %v72, %v72
    %v784 = vunpack.c.l.bf16 %v768
    %v785 = vunpack.c.l.bf16 %v769
    %v786 = vunpack.c.l.bf16 %v770
    %v787 = vunpack.c.l.bf16 %v771
    %v788 = vunpack.c.l.bf16 %v772
    %v789 = vunpack.c.l.bf16 %v773
    %v790 = vunpack.c.l.bf16 %v774
    %v791 = vunpack.c.l.bf16 %v775
    %v792 = vunpack.c.l.bf16 %v776
    %v793 = vunpack.c.l.bf16 %v777
    %v794 = vunpack.c.l.bf16 %v778
    %v795 = vunpack.c.l.bf16 %v779
    %v796 = vunpack.c.l.bf16 %v780
    %v797 = vunpack.c.l.bf16 %v781
    %v798 = vunpack.c.l.bf16 %v782
    %v799 = vunpack.c.l.bf16 %v783
    %v800 = vsub.f32 %v57, %v784
    %v801 = vsub.f32 %v58, %v785
    %v802 = vsub.f32 %v59, %v786
    %v803 = vsub.f32 %v60, %v787
    %v804 = vsub.f32 %v61, %v788
    %v805 = vsub.f32 %v62, %v789
    %v806 = vsub.f32 %v63, %v790
    %v807 = vsub.f32 %v64, %v791
    %v808 = vsub.f32 %v65, %v792
    %v809 = vsub.f32 %v66, %v793
    %v810 = vsub.f32 %v67, %v794
    %v811 = vsub.f32 %v68, %v795
    %v812 = vsub.f32 %v69, %v796
    %v813 = vsub.f32 %v70, %v797
    %v814 = vsub.f32 %v71, %v798
    %v815 = vsub.f32 %v72, %v799
    %816 = vmatpush.msra.mxu0 %v799
    %817 = vmatpush.msra.mxu0 %v798
    %818 = vmatpush.msra.mxu0 %v797
    %819 = vmatpush.msra.mxu0 %v796
    %820 = vmatpush.msra.mxu0 %v795
    %821 = vmatpush.msra.mxu0 %v794
    %822 = vmatpush.msra.mxu0 %v793
    %823 = vmatpush.msra.mxu0 %v792
    %824 = vmatpush.msra.mxu0 %v791
    %825 = vmatpush.msra.mxu0 %v790
    %826 = vmatpush.msra.mxu0 %v789
    %827 = vmatpush.msra.mxu0 %v788
    %828 = vmatpush.msra.mxu0 %v787
    %829 = vmatpush.msra.mxu0 %v786
    %830 = vmatpush.msra.mxu0 %v785
    %831 = vmatpush.msra.mxu0 %v784
    %832 = vmatmul.f32.gmra.mxu0 %v767
    %v833 = vpop.f32.mrf.mxu0
    %v834 = vadd.f32 0.0, %v833
    %835 = vdwg.mxu0
    %836 = vmatpush.msra.mxu0 %v799
    %837 = vmatpush.msra.mxu0 %v798
    %838 = vmatpush.msra.mxu0 %v797
    %839 = vmatpush.msra.mxu0 %v796
    %840 = vmatpush.msra.mxu0 %v795
    %841 = vmatpush.msra.mxu0 %v794
    %842 = vmatpush.msra.mxu0 %v793
    %843 = vmatpush.msra.mxu0 %v792
    %844 = vmatpush.msra.mxu0 %v791
    %845 = vmatpush.msra.mxu0 %v790
    %846 = vmatpush.msra.mxu0 %v789
    %847 = vmatpush.msra.mxu0 %v788
    %848 = vmatpush.msra.mxu0 %v787
    %849 = vmatpush.msra.mxu0 %v786
    %850 = vmatpush.msra.mxu0 %v785
    %851 = vmatpush.msra.mxu0 %v784
    %852 = vmatmul.f32.gmra.mxu0 %v766
    %v853 = vpop.f32.mrf.mxu0
    %v854 = vadd.f32 %v834, %v853
    %855 = vdwg.mxu0
    %856 = vmatpush.msra.mxu0 %v815
    %857 = vmatpush.msra.mxu0 %v814
    %858 = vmatpush.msra.mxu0 %v813
    %859 = vmatpush.msra.mxu0 %v812
    %860 = vmatpush.msra.mxu0 %v811
    %861 = vmatpush.msra.mxu0 %v810
    %862 = vmatpush.msra.mxu0 %v809
    %863 = vmatpush.msra.mxu0 %v808
    %864 = vmatpush.msra.mxu0 %v807
    %865 = vmatpush.msra.mxu0 %v806
    %866 = vmatpush.msra.mxu0 %v805
    %867 = vmatpush.msra.mxu0 %v804
    %868 = vmatpush.msra.mxu0 %v803
    %869 = vmatpush.msra.mxu0 %v802
    %870 = vmatpush.msra.mxu0 %v801
    %871 = vmatpush.msra.mxu0 %v800
    %872 = vmatmul.f32.gmra.mxu0 %v766
    %v873 = vpop.f32.mrf.mxu0
    %v874 = vadd.f32 0.0, %v873
    %875 = vdwg.mxu0
    %v876 = vadd.f32 %v854, %v874
    %v877 = vpack.c.bf16 %v876, %v876
    %v878 = vunpack.c.l.bf16 %v877
    %v879 = vsub.f32 %v876, %v878
    %v880 = vpack.c.bf16 %v73, %v73
    %v881 = vunpack.c.l.bf16 %v880
    %v882 = vsub.f32 %v73, %v881
    %vm883 = vcmask 31744
    %v885 = vsel %vm883, %v879, 0
    %vm887 = vcmask 1043456
    %v889 = vsel %vm887, %v881, 0
    %891 = vmatpush.msra.mxu0 0.0
    %892 = vmatpush.msra.mxu0 0.0
    %893 = vmatpush.msra.mxu0 0.0
    %894 = vmatpush.msra.mxu0 0.0
    %895 = vmatpush.msra.mxu0 0.0
    %896 = vmatpush.msra.mxu0 0.0
    %897 = vmatpush.msra.mxu0 0.0
    %898 = vmatpush.msra.mxu0 0.0
    %899 = vmatpush.msra.mxu0 0.0
    %900 = vmatpush.msra.mxu0 0.0
    %901 = vmatpush.msra.mxu0 0.0
    %902 = vmatpush.msra.mxu0 0.0
    %903 = vmatpush.msra.mxu0 0.0
    %904 = vmatpush.msra.mxu0 0.0
    %905 = vmatpush.msra.mxu0 0.0
    %906 = vmatpush.msra.mxu0 %v889
    %907 = vmatmul.f32.gmra.mxu0 %v885
    %v908 = vpop.f32.mrf.mxu0
    %v909 = vadd.f32 0.0, %v908
    %910 = vdwg.mxu0
    %v912 = vsel %vm883, %v878, 0
    %914 = vmatpush.msra.mxu0 0.0
    %915 = vmatpush.msra.mxu0 0.0
    %916 = vmatpush.msra.mxu0 0.0
    %917 = vmatpush.msra.mxu0 0.0
    %918 = vmatpush.msra.mxu0 0.0
    %919 = vmatpush.msra.mxu0 0.0
    %920 = vmatpush.msra.mxu0 0.0
    %921 = vmatpush.msra.mxu0 0.0
    %922 = vmatpush.msra.mxu0 0.0
    %923 = vmatpush.msra.mxu0 0.0
    %924 = vmatpush.msra.mxu0 0.0
    %925 = vmatpush.msra.mxu0 0.0
    %926 = vmatpush.msra.mxu0 0.0
    %927 = vmatpush.msra.mxu0 0.0
    %928 = vmatpush.msra.mxu0 0.0
    %929 = vmatpush.msra.mxu0 %v889
    %930 = vmatmul.f32.gmra.mxu0 %v912
    %v931 = vpop.f32.mrf.mxu0
    %v932 = vadd.f32 %v909, %v931
    %933 = vdwg.mxu0
    %v935 = vsel %vm887, %v882, 0
    %937 = vmatpush.msra.mxu0 0.0
    %938 = vmatpush.msra.mxu0 0.0
    %939 = vmatpush.msra.mxu0 0.0
    %940 = vmatpush.msra.mxu0 0.0
    %941 = vmatpush.msra.mxu0 0.0
    %942 = vmatpush.msra.mxu0 0.0
    %943 = vmatpush.msra.mxu0 0.0
    %944 = vmatpush.msra.mxu0 0.0
    %945 = vmatpush.msra.mxu0 0.0
    %946 = vmatpush.msra.mxu0 0.0
    %947 = vmatpush.msra.mxu0 0.0
    %948 = vmatpush.msra.mxu0 0.0
    %949 = vmatpush.msra.mxu0 0.0
    %950 = vmatpush.msra.mxu0 0.0
    %951 = vmatpush.msra.mxu0 0.0
    %952 = vmatpush.msra.mxu0 %v935
    %953 = vmatmul.f32.gmra.mxu0 %v912
    %v954 = vpop.f32.mrf.mxu0
    %v955 = vadd.f32 0.0, %v954
    %956 = vdwg.mxu0
    %v957 = vadd.f32 %v932, %v955
    %v958 = vmul.f32 %v957, 0.03125
    %v959 = vsub.f32 %v94, %v958
    %v960 = vmul.f32 %v959, %v959
    %v961 = vpack.c.bf16 %v960, %v960
    %v962 = vunpack.c.l.bf16 %v961
    %v963 = vsub.f32 %v960, %v962
    %964 = vmatpush.msra.mxu0 %v799
    %965 = vmatpush.msra.mxu0 %v798
    %966 = vmatpush.msra.mxu0 %v797
    %967 = vmatpush.msra.mxu0 %v796
    %968 = vmatpush.msra.mxu0 %v795
    %969 = vmatpush.msra.mxu0 %v794
    %970 = vmatpush.msra.mxu0 %v793
    %971 = vmatpush.msra.mxu0 %v792
    %972 = vmatpush.msra.mxu0 %v791
    %973 = vmatpush.msra.mxu0 %v790
    %974 = vmatpush.msra.mxu0 %v789
    %975 = vmatpush.msra.mxu0 %v788
    %976 = vmatpush.msra.mxu0 %v787
    %977 = vmatpush.msra.mxu0 %v786
    %978 = vmatpush.msra.mxu0 %v785
    %979 = vmatpush.msra.mxu0 %v784
    %980 = vmatmul.f32.gmra.mxu0 %v963
    %v981 = vpop.f32.mrf.mxu0
    %v982 = vadd.f32 0.0, %v981
    %983 = vdwg.mxu0
    %984 = vmatpush.msra.mxu0 %v799
    %985 = vmatpush.msra.mxu0 %v798
    %986 = vmatpush.msra.mxu0 %v797
    %987 = vmatpush.msra.mxu0 %v796
    %988 = vmatpush.msra.mxu0 %v795
    %989 = vmatpush.msra.mxu0 %v794
    %990 = vmatpush.msra.mxu0 %v793
    %991 = vmatpush.msra.mxu0 %v792
    %992 = vmatpush.msra.mxu0 %v791
    %993 = vmatpush.msra.mxu0 %v790
    %994 = vmatpush.msra.mxu0 %v789
    %995 = vmatpush.msra.mxu0 %v788
    %996 = vmatpush.msra.mxu0 %v787
    %997 = vmatpush.msra.mxu0 %v786
    %998 = vmatpush.msra.mxu0 %v785
    %999 = vmatpush.msra.mxu0 %v784
    %1000 = vmatmul.f32.gmra.mxu0 %v962
    %v1001 = vpop.f32.mrf.mxu0
    %v1002 = vadd.f32 %v982, %v1001
    %1003 = vdwg.mxu0
    %1004 = vmatpush.msra.mxu0 %v815
    %1005 = vmatpush.msra.mxu0 %v814
    %1006 = vmatpush.msra.mxu0 %v813
    %1007 = vmatpush.msra.mxu0 %v812
    %1008 = vmatpush.msra.mxu0 %v811
    %1009 = vmatpush.msra.mxu0 %v810
    %1010 = vmatpush.msra.mxu0 %v809
    %1011 = vmatpush.msra.mxu0 %v808
    %1012 = vmatpush.msra.mxu0 %v807
    %1013 = vmatpush.msra.mxu0 %v806
    %1014 = vmatpush.msra.mxu0 %v805
    %1015 = vmatpush.msra.mxu0 %v804
    %1016 = vmatpush.msra.mxu0 %v803
    %1017 = vmatpush.msra.mxu0 %v802
    %1018 = vmatpush.msra.mxu0 %v801
    %1019 = vmatpush.msra.mxu0 %v800
    %1020 = vmatmul.f32.gmra.mxu0 %v962
    %v1021 = vpop.f32.mrf.mxu0
    %v1022 = vadd.f32 0.0, %v1021
    %1023 = vdwg.mxu0
    %v1024 = vadd.f32 %v1002, %v1022
    %v1025 = vpack.c.bf16 %v1024, %v1024
    %v1026 = vunpack.c.l.bf16 %v1025
    %v1027 = vsub.f32 %v1024, %v1026
    %v1029 = vsel %vm883, %v1027, 0
    %1031 = vmatpush.msra.mxu0 0.0
    %1032 = vmatpush.msra.mxu0 0.0
    %1033 = vmatpush.msra.mxu0 0.0
    %1034 = vmatpush.msra.mxu0 0.0
    %1035 = vmatpush.msra.mxu0 0.0
    %1036 = vmatpush.msra.mxu0 0.0
    %1037 = vmatpush.msra.mxu0 0.0
    %1038 = vmatpush.msra.mxu0 0.0
    %1039 = vmatpush.msra.mxu0 0.0
    %1040 = vmatpush.msra.mxu0 0.0
    %1041 = vmatpush.msra.mxu0 0.0
    %1042 = vmatpush.msra.mxu0 0.0
    %1043 = vmatpush.msra.mxu0 0.0
    %1044 = vmatpush.msra.mxu0 0.0
    %1045 = vmatpush.msra.mxu0 0.0
    %1046 = vmatpush.msra.mxu0 %v889
    %1047 = vmatmul.f32.gmra.mxu0 %v1029
    %v1048 = vpop.f32.mrf.mxu0
    %v1049 = vadd.f32 0.0, %v1048
    %1050 = vdwg.mxu0
    %v1052 = vsel %vm883, %v1026, 0
    %1054 = vmatpush.msra.mxu0 0.0
    %1055 = vmatpush.msra.mxu0 0.0
    %1056 = vmatpush.msra.mxu0 0.0
    %1057 = vmatpush.msra.mxu0 0.0
    %1058 = vmatpush.msra.mxu0 0.0
    %1059 = vmatpush.msra.mxu0 0.0
    %1060 = vmatpush.msra.mxu0 0.0
    %1061 = vmatpush.msra.mxu0 0.0
    %1062 = vmatpush.msra.mxu0 0.0
    %1063 = vmatpush.msra.mxu0 0.0
    %1064 = vmatpush.msra.mxu0 0.0
    %1065 = vmatpush.msra.mxu0 0.0
    %1066 = vmatpush.msra.mxu0 0.0
    %1067 = vmatpush.msra.mxu0 0.0
    %1068 = vmatpush.msra.mxu0 0.0
    %1069 = vmatpush.msra.mxu0 %v889
    %1070 = vmatmul.f32.gmra.mxu0 %v1052
    %v1071 = vpop.f32.mrf.mxu0
    %v1072 = vadd.f32 %v1049, %v1071
    %1073 = vdwg.mxu0
    %1074 = vmatpush.msra.mxu0 0.0
    %1075 = vmatpush.msra.mxu0 0.0
    %1076 = vmatpush.msra.mxu0 0.0
    %1077 = vmatpush.msra.mxu0 0.0
    %1078 = vmatpush.msra.mxu0 0.0
    %1079 = vmatpush.msra.mxu0 0.0
    %1080 = vmatpush.msra.mxu0 0.0
    %1081 = vmatpush.msra.mxu0 0.0
    %1082 = vmatpush.msra.mxu0 0.0
    %1083 = vmatpush.msra.mxu0 0.0
    %1084 = vmatpush.msra.mxu0 0.0
    %1085 = vmatpush.msra.mxu0 0.0
    %1086 = vmatpush.msra.mxu0 0.0
    %1087 = vmatpush.msra.mxu0 0.0
    %1088 = vmatpush.msra.mxu0 0.0
    %1089 = vmatpush.msra.mxu0 %v935
    %1090 = vmatmul.f32.gmra.mxu0 %v1052
    %v1091 = vpop.f32.mrf.mxu0
    %v1092 = vadd.f32 0.0, %v1091
    %1093 = vdwg.mxu0
    %v1094 = vadd.f32 %v1072, %v1092
    %v1095 = vmul.f32 %v1094, 0.03125
    %v1096 = vadd.f32 %v1095, 1e-05
    %v1097 = vrsqrt.pop %v1096
    %v1098 = vmul.f32 %v1097, %v1096
    %v1099 = vmul.f32 %v1098, %v1097
    %v1100 = vmul.f32 0.5, %v1099
    %v1101 = vsub.f32 1.5, %v1100
    %v1102 = vmul.f32 %v1097, %v1101
    %vm1103 = vweird.f32 %v1096
    %vm1104 = vweird.f32 %v1097
    %vm1105 = vmor %vm1103, %vm1104
    %v1106 = vsel %vm1105, %v1097, %v1102
    %v1107 = vmul.f32 %v959, %v1106
    %v1108 = vperm.slane %v694, 0
    %v1109 = vmul.f32 %v1107, %v1108
    %v1110 = vperm.slane %v764, 0
    %v1111 = vadd.f32 %v1109, %v1110
    %1112 = vst [vmem:[#allocation2] sm:$0x3] %v1111
    // Predicated region
    $region70: #{tpu_custom_call.1} parent=1 // pred_check
      _
    $region71: #{tpu_custom_call.1} parent=1 // pred_check_branch
      %1114 = sbr.rel (0) target = $region73
    $region72: #{tpu_custom_call.1} parent=1 // pred_region
      %1116 = vsyncadd [#allocation3], 0
      %s1118 = sshll.u32 [#allocation2], 4
      %s1119 = int_to_ptr.vmem [resolvable:$true] %s1118
      %s1120 = sshll.u32 %s17, 4
      %s1121 = int_to_ptr.hbm [resolvable:$true] %s1120
      %1123 = dma.vmem_to_hbm [thread:$0]  %s1119, 32, %s1121, [#allocation3]
    $region73: #{tpu_custom_call.1} parent=1 // pred_fallthru
      _
    // Predicated region
    $region74: #{tpu_custom_call.1} parent=1 // pred_check
      _
    $region75: #{tpu_custom_call.1} parent=1 // pred_check_branch
      %1125 = sbr.rel (0) target = $region77
    $region76: #{tpu_custom_call.1} parent=1 // pred_region
      %1127 = dma.done [#allocation3], 32
    $region77: #{tpu_custom_call.1} parent=1 // pred_fallthru
      _
    %1128 = vsyncpa [#allocation3], 1

</llo_original>
